<compile_context>
chip_gen: v7x
topology: tpu7x:2x2x1
jax: 0.10.0
libtpu: 0.0.40
codegen_flags: <defaults>
</compile_context>

<pallas_src>
import functools
import math

import jax
import jax.numpy as jnp
import numpy as np
from jax.experimental import pallas as pl
from jax.experimental.pallas import tpu as pltpu

_LANES = 128
_MAX_TILE_ELEMS = 512 * 1024   # 2 MiB of f32 per tile buffer; (in+out) double-
                               # buffered stays well under every gen's scoped VMEM.


def _mix32(x):
    """lowbias32 integer mixer (uint32 -> uint32); pure VPU int ops."""
    x = x ^ (x >> jnp.uint32(16))
    x = x * jnp.uint32(0x7FEB352D)
    x = x ^ (x >> jnp.uint32(15))
    x = x * jnp.uint32(0x846CA68B)
    x = x ^ (x >> jnp.uint32(16))
    return x


def _add_gaussian_noise_kernel(seed_ref, x_ref, o_ref, *, std):
    rows, width = x_ref.shape
    # Global element index of every lane in this tile -> unique RNG counter per
    # element across the whole grid (distinct noise per tile / TensorCore).
    base = pl.program_id(0) * (rows * width)
    row = jax.lax.broadcasted_iota(jnp.int32, (rows, width), 0)
    col = jax.lax.broadcasted_iota(jnp.int32, (rows, width), 1)
    idx = (base + row * width + col).astype(jnp.uint32)

    # Counter-based RNG: two hashed streams per element.
    seed_mix = _mix32(seed_ref[0].astype(jnp.uint32))
    k = idx * jnp.uint32(2) + seed_mix
    bits1 = _mix32(k)
    bits2 = _mix32(k + jnp.uint32(1))

    # 23 bits -> uniforms; Box-Muller -> standard normal (f32 throughout).
    inv24 = jnp.float32(1.0 / 8388608.0)                                  # 2**-23
    u1 = ((bits1 >> jnp.uint32(9)).astype(jnp.int32).astype(jnp.float32)
          + jnp.float32(1.0)) * inv24                                      # (0, 1]
    theta = ((bits2 >> jnp.uint32(9)).astype(jnp.int32).astype(jnp.float32)
             * jnp.float32(2.0 * math.pi / 8388608.0))                     # [0, 2pi)
    noise = jnp.sqrt(jnp.float32(-2.0) * jnp.log(u1)) * jnp.cos(theta)

    o_ref[...] = (x_ref[...].astype(jnp.float32)
                  + noise * jnp.float32(std)).astype(o_ref.dtype)


def _pick_width(n):
    """Widest lane-dense last dim (multiple of 128) with small pad overhead."""
    for w in (4096, 2048, 1024, 512, 256, 128):
        if n % w == 0 or n >= 8 * w:
            return w
    return _LANES


def add_gaussian_noise(x, seed, std=0.0):
    """Pallas equivalent of AddGaussianNoise(std).forward(x)."""
    if float(std) == 0.0:
        return x   # trace-time fast path: identity, no PRNG / HBM pass / launch

    orig_shape = x.shape
    orig_dtype = x.dtype
    n = int(np.prod(orig_shape))

    width = _pick_width(n)
    rows = -(-n // width)
    pad = rows * width - n

    flat = x.reshape(-1)
    if pad:
        flat = jnp.pad(flat, (0, pad))   # only for ragged sizes; pad == 0 here
    x2d = flat.reshape(rows, width)

    # Tile the row axis so each (tile_rows, width) buffer is <= ~2 MiB.
    max_rows = max(8, (_MAX_TILE_ELEMS // width) // 8 * 8)
    if rows <= max_rows:
        tile_rows = rows                 # single block == full array (toy sizes)
        grid = (1,)
    else:
        tile_rows = max_rows             # (8,128)-aligned; ragged edge handled
        grid = (-(-rows // tile_rows),)

    seed_arr = jnp.asarray([seed], dtype=jnp.int32)

    cost = pl.CostEstimate(
        flops=20 * rows * width,
        transcendentals=3 * rows * width,
        bytes_accessed=2 * rows * width * np.dtype(orig_dtype).itemsize,
    )

    out2d = pl.pallas_call(
        functools.partial(_add_gaussian_noise_kernel, std=float(std)),
        out_shape=jax.ShapeDtypeStruct((rows, width), orig_dtype),
        grid=grid,
        in_specs=[
            pl.BlockSpec(memory_space=pltpu.MemorySpace.SMEM),        # seed scalar
            pl.BlockSpec((tile_rows, width), lambda i: (i, 0)),        # x tile
        ],
        out_specs=pl.BlockSpec((tile_rows, width), lambda i: (i, 0)),
        compiler_params=pltpu.CompilerParams(
            dimension_semantics=("parallel",),   # independent row tiles (v7x 2 TC)
            vmem_limit_bytes=32 * 1024 * 1024,
        ),
        cost_estimate=cost,
    )(seed_arr, x2d)

    out = out2d.reshape(-1)
    if pad:
        out = out[:n]
    return out.reshape(orig_shape)


if __name__ == "__main__":
    key = jax.random.PRNGKey(0)
    x = jax.random.normal(key, (2, 4, 16, 16), dtype=jnp.float32)

    # std = 0 case: output must equal the input exactly (identity fast path).
    y0 = jax.block_until_ready(add_gaussian_noise(x, seed=0, std=0.0))
    assert y0.shape == x.shape and y0.dtype == x.dtype
    assert jnp.allclose(y0, x), "std=0 must be identity"

    # std > 0 case: output = x + N(0,1)*std, deterministic per seed.
    y1 = jax.block_until_ready(add_gaussian_noise(x, seed=1234, std=0.5))
    y2 = jax.block_until_ready(add_gaussian_noise(x, seed=1234, std=0.5))
    assert y1.shape == x.shape and y1.dtype == x.dtype
    assert jnp.array_equal(y1, y2), "same seed must be deterministic"
    assert not jnp.allclose(y1, x), "noise should perturb the input"

    noise = (y1 - x) / 0.5
    assert abs(float(noise.mean())) < 0.1, "noise mean should be ~0"
    assert 0.8 < float(noise.std()) < 1.2, "noise std should be ~1"

    print("KERNEL_OK")
</pallas_src>

<mosaic_0001>
module attributes {stable_mosaic.version = 11 : i64} {
  func.func @_add_gaussian_noise_kernel(%arg0: i32, %arg1: memref<1xi32, #tpu.memory_space<smem>>, %arg2: memref<1x2048xf32, #tpu.memory_space<vmem>>, %arg3: memref<1x2048xf32, #tpu.memory_space<vmem>>) attributes {dimension_semantics = [#tpu.dimension_semantics<parallel>], iteration_bounds = array<i64: 1>, scalar_prefetch = 0 : i64, scratch_operands = 0 : i64, tpu.core_type = #tpu.core_type<tc>, window_params = [{transform_indices = @transform_0, window_bounds = array<i64: 1>}, {transform_indices = @transform_1, window_bounds = array<i64: 1, 2048>}, {transform_indices = @transform_2, window_bounds = array<i64: 1, 2048>}]} {
    %c2048_i32 = arith.constant 2048 : i32
    %0 = arith.muli %arg0, %c2048_i32 : i32
    %1 = tpu.iota {dimensions = array<i32: 0>} : vector<1x2048xi32>
    %2 = tpu.iota {dimensions = array<i32: 1>} : vector<1x2048xi32>
    %c2048_i32_0 = arith.constant 2048 : i32
    %3 = vector.broadcast %c2048_i32_0 : i32 to vector<1x2048xi32>
    %4 = arith.muli %1, %3 : vector<1x2048xi32>
    %5 = vector.broadcast %0 : i32 to vector<1x2048xi32>
    %6 = arith.addi %5, %4 : vector<1x2048xi32>
    %7 = arith.addi %6, %2 : vector<1x2048xi32>
    %c0 = arith.constant 0 : index
    %8 = memref.load %arg1[%c0] : memref<1xi32, #tpu.memory_space<smem>>
    %c16_i32 = arith.constant 16 : i32
    %9 = arith.shrui %8, %c16_i32 : i32
    %10 = arith.xori %8, %9 : i32
    %c2146121005_i32 = arith.constant 2146121005 : i32
    %11 = arith.muli %10, %c2146121005_i32 : i32
    %c15_i32 = arith.constant 15 : i32
    %12 = arith.shrui %11, %c15_i32 : i32
    %13 = arith.xori %11, %12 : i32
    %c-2073254261_i32 = arith.constant -2073254261 : i32
    %14 = arith.muli %13, %c-2073254261_i32 : i32
    %c16_i32_1 = arith.constant 16 : i32
    %15 = arith.shrui %14, %c16_i32_1 : i32
    %16 = arith.xori %14, %15 : i32
    %c2_i32 = arith.constant 2 : i32
    %17 = vector.broadcast %c2_i32 : i32 to vector<1x2048xi32>
    %18 = arith.muli %7, %17 : vector<1x2048xi32>
    %19 = vector.broadcast %16 : i32 to vector<1x2048xi32>
    %20 = arith.addi %18, %19 : vector<1x2048xi32>
    %c16_i32_2 = arith.constant 16 : i32
    %21 = vector.broadcast %c16_i32_2 : i32 to vector<1x2048xi32>
    %22 = arith.shrui %20, %21 : vector<1x2048xi32>
    %23 = arith.xori %20, %22 : vector<1x2048xi32>
    %c2146121005_i32_3 = arith.constant 2146121005 : i32
    %24 = vector.broadcast %c2146121005_i32_3 : i32 to vector<1x2048xi32>
    %25 = arith.muli %23, %24 : vector<1x2048xi32>
    %c15_i32_4 = arith.constant 15 : i32
    %26 = vector.broadcast %c15_i32_4 : i32 to vector<1x2048xi32>
    %27 = arith.shrui %25, %26 : vector<1x2048xi32>
    %28 = arith.xori %25, %27 : vector<1x2048xi32>
    %c-2073254261_i32_5 = arith.constant -2073254261 : i32
    %29 = vector.broadcast %c-2073254261_i32_5 : i32 to vector<1x2048xi32>
    %30 = arith.muli %28, %29 : vector<1x2048xi32>
    %c16_i32_6 = arith.constant 16 : i32
    %31 = vector.broadcast %c16_i32_6 : i32 to vector<1x2048xi32>
    %32 = arith.shrui %30, %31 : vector<1x2048xi32>
    %33 = arith.xori %30, %32 : vector<1x2048xi32>
    %c1_i32 = arith.constant 1 : i32
    %34 = vector.broadcast %c1_i32 : i32 to vector<1x2048xi32>
    %35 = arith.addi %20, %34 : vector<1x2048xi32>
    %c16_i32_7 = arith.constant 16 : i32
    %36 = vector.broadcast %c16_i32_7 : i32 to vector<1x2048xi32>
    %37 = arith.shrui %35, %36 : vector<1x2048xi32>
    %38 = arith.xori %35, %37 : vector<1x2048xi32>
    %c2146121005_i32_8 = arith.constant 2146121005 : i32
    %39 = vector.broadcast %c2146121005_i32_8 : i32 to vector<1x2048xi32>
    %40 = arith.muli %38, %39 : vector<1x2048xi32>
    %c15_i32_9 = arith.constant 15 : i32
    %41 = vector.broadcast %c15_i32_9 : i32 to vector<1x2048xi32>
    %42 = arith.shrui %40, %41 : vector<1x2048xi32>
    %43 = arith.xori %40, %42 : vector<1x2048xi32>
    %c-2073254261_i32_10 = arith.constant -2073254261 : i32
    %44 = vector.broadcast %c-2073254261_i32_10 : i32 to vector<1x2048xi32>
    %45 = arith.muli %43, %44 : vector<1x2048xi32>
    %c16_i32_11 = arith.constant 16 : i32
    %46 = vector.broadcast %c16_i32_11 : i32 to vector<1x2048xi32>
    %47 = arith.shrui %45, %46 : vector<1x2048xi32>
    %48 = arith.xori %45, %47 : vector<1x2048xi32>
    %c9_i32 = arith.constant 9 : i32
    %49 = vector.broadcast %c9_i32 : i32 to vector<1x2048xi32>
    %50 = arith.shrui %33, %49 : vector<1x2048xi32>
    %51 = arith.sitofp %50 : vector<1x2048xi32> to vector<1x2048xf32>
    %cst = arith.constant 1.000000e+00 : f32
    %52 = vector.broadcast %cst : f32 to vector<1x2048xf32>
    %53 = arith.addf %51, %52 : vector<1x2048xf32>
    %cst_12 = arith.constant 1.1920929E-7 : f32
    %54 = vector.broadcast %cst_12 : f32 to vector<1x2048xf32>
    %55 = arith.mulf %53, %54 : vector<1x2048xf32>
    %c9_i32_13 = arith.constant 9 : i32
    %56 = vector.broadcast %c9_i32_13 : i32 to vector<1x2048xi32>
    %57 = arith.shrui %48, %56 : vector<1x2048xi32>
    %58 = arith.sitofp %57 : vector<1x2048xi32> to vector<1x2048xf32>
    %cst_14 = arith.constant 7.49014077E-7 : f32
    %59 = vector.broadcast %cst_14 : f32 to vector<1x2048xf32>
    %60 = arith.mulf %58, %59 : vector<1x2048xf32>
    %61 = math.log %55 : vector<1x2048xf32>
    %cst_15 = arith.constant -2.000000e+00 : f32
    %62 = vector.broadcast %cst_15 : f32 to vector<1x2048xf32>
    %63 = arith.mulf %62, %61 : vector<1x2048xf32>
    %64 = math.sqrt %63 : vector<1x2048xf32>
    %65 = math.cos %60 : vector<1x2048xf32>
    %66 = arith.mulf %64, %65 : vector<1x2048xf32>
    %c0_16 = arith.constant 0 : index
    %c0_17 = arith.constant 0 : index
    %67 = vector.load %arg2[%c0_16, %c0_17] : memref<1x2048xf32, #tpu.memory_space<vmem>>, vector<1x2048xf32>
    %cst_18 = arith.constant 5.000000e-01 : f32
    %68 = vector.broadcast %cst_18 : f32 to vector<1x2048xf32>
    %69 = arith.mulf %66, %68 : vector<1x2048xf32>
    %70 = arith.addf %67, %69 : vector<1x2048xf32>
    %c0_19 = arith.constant 0 : index
    %c0_20 = arith.constant 0 : index
    %71 = vector.load %arg3[%c0_19, %c0_20] : memref<1x2048xf32, #tpu.memory_space<vmem>>, vector<1x2048xf32>
    tpu.vector_store %arg3[%c0_19, %c0_20], %70 {strides = array<i32>} : memref<1x2048xf32, #tpu.memory_space<vmem>>, vector<1x2048xf32>,
    return
  }
  func.func @transform_0(%arg0: i32) -> i32 {
    %c0_i32 = arith.constant 0 : i32
    %c0_i32_0 = arith.constant 0 : i32
    return %c0_i32 : i32
  }
  func.func @transform_1(%arg0: i32) -> (i32, i32) {
    %c0_i32 = arith.constant 0 : i32
    %c0_i32_0 = arith.constant 0 : i32
    return %arg0, %c0_i32 : i32, i32
  }
  func.func @transform_2(%arg0: i32) -> (i32, i32) {
    %c0_i32 = arith.constant 0 : i32
    %c0_i32_0 = arith.constant 0 : i32
    return %arg0, %c0_i32 : i32, i32
  }
}

</mosaic_0001>

<llo_original>
// kernel: tpu_custom_call.1
$region0: #{tpu_custom_call.1}
  #allocation0 [shape = 'u32[]', space=smem, size = 0x4, offset = 0x4, fixed_abs, tag = 'smem constant byte address 0x4 - core index']
  #allocation1 [shape = 'u32[144,128]{1,0:T(1,128)}', space=vmem, size = 0x12000, scoped, tag = 'internal scratch']
  #allocation2 [shape = 's32[1]{0:T(128)S(6)}', space=smem, size = 0x200, scoped, tag = 'scoped memory for tpu_custom_call.1']
  %s0 = inlined_call_operand.<no memory space> [shape: s32[1], index: 0, kind: input, shape index: {}]
  %s1 = inlined_call_operand.hbm [shape: f32[1,2048], index: 1, kind: input, shape index: {}]
  %s2 = inlined_call_operand.hbm [shape: f32[1,2048], index: 2, kind: output, shape index: {}]
  %s3 = sld [smem:[#allocation0]]
  $region22: #{tpu_custom_call.1} parent=0
    _
  %s5 = ssub.s32 1, %s3
  %s6 = scalar_select 0, %s5, %s3
  %7 = sst [smem:[#allocation2]] %s0
  $region1: #{tpu_custom_call.1} parent=0
    #allocation3 [shape = 'u8[8192]{0}', space=vmem, size = 0x2000, scoped, tag = 'input window, operand 1, single buffered']
    #allocation4 [shape = 's32[1]{0}', space=sflag, size = 0x4, scoped, tag = 'scoped memory for tpu_custom_call.1']
    #allocation5 [shape = 's32[1]{0}', space=sflag, size = 0x4, scoped, tag = 'scoped memory for tpu_custom_call.1']
    #allocation6 [shape = 'u8[8192]{0}', space=vmem, size = 0x2000, scoped, tag = 'output window, operand 0, single buffered']
    %8 = vsyncpa [#allocation4], 0
    %9 = vsyncpa [#allocation5], 0
    // Predicated region
    $region2: #{tpu_custom_call.1} parent=1 // pred_check
      _
    $region3: #{tpu_custom_call.1} parent=1 // pred_check_branch
      %11 = sbr.rel (0) target = $region5
    $region4: #{tpu_custom_call.1} parent=1 // pred_region
      _
    $region5: #{tpu_custom_call.1} parent=1 // pred_fallthru
      _
    // Predicated region
    $region6: #{tpu_custom_call.1} parent=1 // pred_check
      _
    $region7: #{tpu_custom_call.1} parent=1 // pred_check_branch
      %13 = sbr.rel (0) target = $region9
    $region8: #{tpu_custom_call.1} parent=1 // pred_region
      %s15 = ssub.s32 256, 256
      %16 = vsyncadd [#allocation4], %s15
      %s18 = sshll.u32 [#allocation3], 4
      %s19 = int_to_ptr.vmem [resolvable:$true] %s18
      %21 = dma.hbm_to_vmem [thread:$0]  %s1, 256, %s19, [#allocation4]
    $region9: #{tpu_custom_call.1} parent=1 // pred_fallthru
      _
    // Predicated region
    $region10: #{tpu_custom_call.1} parent=1 // pred_check
      _
    $region11: #{tpu_custom_call.1} parent=1 // pred_check_branch
      %23 = sbr.rel (0) target = $region13
    $region12: #{tpu_custom_call.1} parent=1 // pred_region
      %24 = dma.done [#allocation4], 256
    $region13: #{tpu_custom_call.1} parent=1 // pred_fallthru
      _
    %s25 = smul.u32 0, 2048
    %v26 = vlaneseq
    %v27 = vshrl.u32 %v26, 7
    %v28 = vlaneseq
    %v29 = vand.u32 %v28, 127
    %v30 = vadd.s32 %v29, 128
    %v31 = vadd.s32 %v29, 256
    %v32 = vadd.s32 %v29, 384
    %v33 = vadd.s32 %v29, 512
    %v34 = vadd.s32 %v29, 640
    %v35 = vadd.s32 %v29, 768
    %v36 = vadd.s32 %v29, 896
    %v37 = vadd.s32 %v29, 1024
    %v38 = vadd.s32 %v29, 1152
    %v39 = vadd.s32 %v29, 1280
    %v40 = vadd.s32 %v29, 1408
    %v41 = vadd.s32 %v29, 1536
    %v42 = vadd.s32 %v29, 1664
    %v43 = vadd.s32 %v29, 1792
    %v44 = vadd.s32 %v29, 1920
    %v45 = vmul.u32 %v27, 2048
    %v46 = vstv %s25
    %v47 = vadd.s32 %v46, %v45
    %v48 = vadd.s32 %v47, %v29
    %v49 = vadd.s32 %v47, %v30
    %v50 = vadd.s32 %v47, %v31
    %v51 = vadd.s32 %v47, %v32
    %v52 = vadd.s32 %v47, %v33
    %v53 = vadd.s32 %v47, %v34
    %v54 = vadd.s32 %v47, %v35
    %v55 = vadd.s32 %v47, %v36
    %v56 = vadd.s32 %v47, %v37
    %v57 = vadd.s32 %v47, %v38
    %v58 = vadd.s32 %v47, %v39
    %v59 = vadd.s32 %v47, %v40
    %v60 = vadd.s32 %v47, %v41
    %v61 = vadd.s32 %v47, %v42
    %v62 = vadd.s32 %v47, %v43
    %v63 = vadd.s32 %v47, %v44
    %s64 = sld [smem:[#allocation2]]
    %s65 = sshrl.u32 %s64, 16
    %s66 = sxor.u32 %s64, %s65
    %s67 = smul.u32 %s66, 2146121005
    %s68 = sshrl.u32 %s67, 15
    %s69 = sxor.u32 %s67, %s68
    %s70 = smul.u32 %s69, 2221713035
    %s71 = sshrl.u32 %s70, 16
    %s72 = sxor.u32 %s70, %s71
    %v73 = vmul.u32 %v48, 2
    %v74 = vmul.u32 %v49, 2
    %v75 = vmul.u32 %v50, 2
    %v76 = vmul.u32 %v51, 2
    %v77 = vmul.u32 %v52, 2
    %v78 = vmul.u32 %v53, 2
    %v79 = vmul.u32 %v54, 2
    %v80 = vmul.u32 %v55, 2
    %v81 = vmul.u32 %v56, 2
    %v82 = vmul.u32 %v57, 2
    %v83 = vmul.u32 %v58, 2
    %v84 = vmul.u32 %v59, 2
    %v85 = vmul.u32 %v60, 2
    %v86 = vmul.u32 %v61, 2
    %v87 = vmul.u32 %v62, 2
    %v88 = vmul.u32 %v63, 2
    %v89 = vstv %s72
    %v90 = vadd.s32 %v73, %v89
    %v91 = vadd.s32 %v74, %v89
    %v92 = vadd.s32 %v75, %v89
    %v93 = vadd.s32 %v76, %v89
    %v94 = vadd.s32 %v77, %v89
    %v95 = vadd.s32 %v78, %v89
    %v96 = vadd.s32 %v79, %v89
    %v97 = vadd.s32 %v80, %v89
    %v98 = vadd.s32 %v81, %v89
    %v99 = vadd.s32 %v82, %v89
    %v100 = vadd.s32 %v83, %v89
    %v101 = vadd.s32 %v84, %v89
    %v102 = vadd.s32 %v85, %v89
    %v103 = vadd.s32 %v86, %v89
    %v104 = vadd.s32 %v87, %v89
    %v105 = vadd.s32 %v88, %v89
    %v106 = vshrl.u32 %v90, 16
    %v107 = vshrl.u32 %v91, 16
    %v108 = vshrl.u32 %v92, 16
    %v109 = vshrl.u32 %v93, 16
    %v110 = vshrl.u32 %v94, 16
    %v111 = vshrl.u32 %v95, 16
    %v112 = vshrl.u32 %v96, 16
    %v113 = vshrl.u32 %v97, 16
    %v114 = vshrl.u32 %v98, 16
    %v115 = vshrl.u32 %v99, 16
    %v116 = vshrl.u32 %v100, 16
    %v117 = vshrl.u32 %v101, 16
    %v118 = vshrl.u32 %v102, 16
    %v119 = vshrl.u32 %v103, 16
    %v120 = vshrl.u32 %v104, 16
    %v121 = vshrl.u32 %v105, 16
    %v122 = vxor.u32 %v90, %v106
    %v123 = vxor.u32 %v91, %v107
    %v124 = vxor.u32 %v92, %v108
    %v125 = vxor.u32 %v93, %v109
    %v126 = vxor.u32 %v94, %v110
    %v127 = vxor.u32 %v95, %v111
    %v128 = vxor.u32 %v96, %v112
    %v129 = vxor.u32 %v97, %v113
    %v130 = vxor.u32 %v98, %v114
    %v131 = vxor.u32 %v99, %v115
    %v132 = vxor.u32 %v100, %v116
    %v133 = vxor.u32 %v101, %v117
    %v134 = vxor.u32 %v102, %v118
    %v135 = vxor.u32 %v103, %v119
    %v136 = vxor.u32 %v104, %v120
    %v137 = vxor.u32 %v105, %v121
    %v138 = vmul.u32 %v122, 2146121005
    %v139 = vmul.u32 %v123, 2146121005
    %v140 = vmul.u32 %v124, 2146121005
    %v141 = vmul.u32 %v125, 2146121005
    %v142 = vmul.u32 %v126, 2146121005
    %v143 = vmul.u32 %v127, 2146121005
    %v144 = vmul.u32 %v128, 2146121005
    %v145 = vmul.u32 %v129, 2146121005
    %v146 = vmul.u32 %v130, 2146121005
    %v147 = vmul.u32 %v131, 2146121005
    %v148 = vmul.u32 %v132, 2146121005
    %v149 = vmul.u32 %v133, 2146121005
    %v150 = vmul.u32 %v134, 2146121005
    %v151 = vmul.u32 %v135, 2146121005
    %v152 = vmul.u32 %v136, 2146121005
    %v153 = vmul.u32 %v137, 2146121005
    %v154 = vshrl.u32 %v138, 15
    %v155 = vshrl.u32 %v139, 15
    %v156 = vshrl.u32 %v140, 15
    %v157 = vshrl.u32 %v141, 15
    %v158 = vshrl.u32 %v142, 15
    %v159 = vshrl.u32 %v143, 15
    %v160 = vshrl.u32 %v144, 15
    %v161 = vshrl.u32 %v145, 15
    %v162 = vshrl.u32 %v146, 15
    %v163 = vshrl.u32 %v147, 15
    %v164 = vshrl.u32 %v148, 15
    %v165 = vshrl.u32 %v149, 15
    %v166 = vshrl.u32 %v150, 15
    %v167 = vshrl.u32 %v151, 15
    %v168 = vshrl.u32 %v152, 15
    %v169 = vshrl.u32 %v153, 15
    %v170 = vxor.u32 %v138, %v154
    %v171 = vxor.u32 %v139, %v155
    %v172 = vxor.u32 %v140, %v156
    %v173 = vxor.u32 %v141, %v157
    %v174 = vxor.u32 %v142, %v158
    %v175 = vxor.u32 %v143, %v159
    %v176 = vxor.u32 %v144, %v160
    %v177 = vxor.u32 %v145, %v161
    %v178 = vxor.u32 %v146, %v162
    %v179 = vxor.u32 %v147, %v163
    %v180 = vxor.u32 %v148, %v164
    %v181 = vxor.u32 %v149, %v165
    %v182 = vxor.u32 %v150, %v166
    %v183 = vxor.u32 %v151, %v167
    %v184 = vxor.u32 %v152, %v168
    %v185 = vxor.u32 %v153, %v169
    %v186 = vmul.u32 %v170, 2221713035
    %v187 = vmul.u32 %v171, 2221713035
    %v188 = vmul.u32 %v172, 2221713035
    %v189 = vmul.u32 %v173, 2221713035
    %v190 = vmul.u32 %v174, 2221713035
    %v191 = vmul.u32 %v175, 2221713035
    %v192 = vmul.u32 %v176, 2221713035
    %v193 = vmul.u32 %v177, 2221713035
    %v194 = vmul.u32 %v178, 2221713035
    %v195 = vmul.u32 %v179, 2221713035
    %v196 = vmul.u32 %v180, 2221713035
    %v197 = vmul.u32 %v181, 2221713035
    %v198 = vmul.u32 %v182, 2221713035
    %v199 = vmul.u32 %v183, 2221713035
    %v200 = vmul.u32 %v184, 2221713035
    %v201 = vmul.u32 %v185, 2221713035
    %v202 = vshrl.u32 %v186, 16
    %v203 = vshrl.u32 %v187, 16
    %v204 = vshrl.u32 %v188, 16
    %v205 = vshrl.u32 %v189, 16
    %v206 = vshrl.u32 %v190, 16
    %v207 = vshrl.u32 %v191, 16
    %v208 = vshrl.u32 %v192, 16
    %v209 = vshrl.u32 %v193, 16
    %v210 = vshrl.u32 %v194, 16
    %v211 = vshrl.u32 %v195, 16
    %v212 = vshrl.u32 %v196, 16
    %v213 = vshrl.u32 %v197, 16
    %v214 = vshrl.u32 %v198, 16
    %v215 = vshrl.u32 %v199, 16
    %v216 = vshrl.u32 %v200, 16
    %v217 = vshrl.u32 %v201, 16
    %v218 = vxor.u32 %v186, %v202
    %v219 = vxor.u32 %v187, %v203
    %v220 = vxor.u32 %v188, %v204
    %v221 = vxor.u32 %v189, %v205
    %v222 = vxor.u32 %v190, %v206
    %v223 = vxor.u32 %v191, %v207
    %v224 = vxor.u32 %v192, %v208
    %v225 = vxor.u32 %v193, %v209
    %v226 = vxor.u32 %v194, %v210
    %v227 = vxor.u32 %v195, %v211
    %v228 = vxor.u32 %v196, %v212
    %v229 = vxor.u32 %v197, %v213
    %v230 = vxor.u32 %v198, %v214
    %v231 = vxor.u32 %v199, %v215
    %v232 = vxor.u32 %v200, %v216
    %v233 = vxor.u32 %v201, %v217
    %v234 = vadd.s32 %v90, 1
    %v235 = vadd.s32 %v91, 1
    %v236 = vadd.s32 %v92, 1
    %v237 = vadd.s32 %v93, 1
    %v238 = vadd.s32 %v94, 1
    %v239 = vadd.s32 %v95, 1
    %v240 = vadd.s32 %v96, 1
    %v241 = vadd.s32 %v97, 1
    %v242 = vadd.s32 %v98, 1
    %v243 = vadd.s32 %v99, 1
    %v244 = vadd.s32 %v100, 1
    %v245 = vadd.s32 %v101, 1
    %v246 = vadd.s32 %v102, 1
    %v247 = vadd.s32 %v103, 1
    %v248 = vadd.s32 %v104, 1
    %v249 = vadd.s32 %v105, 1
    %v250 = vshrl.u32 %v234, 16
    %v251 = vshrl.u32 %v235, 16
    %v252 = vshrl.u32 %v236, 16
    %v253 = vshrl.u32 %v237, 16
    %v254 = vshrl.u32 %v238, 16
    %v255 = vshrl.u32 %v239, 16
    %v256 = vshrl.u32 %v240, 16
    %v257 = vshrl.u32 %v241, 16
    %v258 = vshrl.u32 %v242, 16
    %v259 = vshrl.u32 %v243, 16
    %v260 = vshrl.u32 %v244, 16
    %v261 = vshrl.u32 %v245, 16
    %v262 = vshrl.u32 %v246, 16
    %v263 = vshrl.u32 %v247, 16
    %v264 = vshrl.u32 %v248, 16
    %v265 = vshrl.u32 %v249, 16
    %v266 = vxor.u32 %v234, %v250
    %v267 = vxor.u32 %v235, %v251
    %v268 = vxor.u32 %v236, %v252
    %v269 = vxor.u32 %v237, %v253
    %v270 = vxor.u32 %v238, %v254
    %v271 = vxor.u32 %v239, %v255
    %v272 = vxor.u32 %v240, %v256
    %v273 = vxor.u32 %v241, %v257
    %v274 = vxor.u32 %v242, %v258
    %v275 = vxor.u32 %v243, %v259
    %v276 = vxor.u32 %v244, %v260
    %v277 = vxor.u32 %v245, %v261
    %v278 = vxor.u32 %v246, %v262
    %v279 = vxor.u32 %v247, %v263
    %v280 = vxor.u32 %v248, %v264
    %v281 = vxor.u32 %v249, %v265
    %v282 = vmul.u32 %v266, 2146121005
    %v283 = vmul.u32 %v267, 2146121005
    %v284 = vmul.u32 %v268, 2146121005
    %v285 = vmul.u32 %v269, 2146121005
    %v286 = vmul.u32 %v270, 2146121005
    %v287 = vmul.u32 %v271, 2146121005
    %v288 = vmul.u32 %v272, 2146121005
    %v289 = vmul.u32 %v273, 2146121005
    %v290 = vmul.u32 %v274, 2146121005
    %v291 = vmul.u32 %v275, 2146121005
    %v292 = vmul.u32 %v276, 2146121005
    %v293 = vmul.u32 %v277, 2146121005
    %v294 = vmul.u32 %v278, 2146121005
    %v295 = vmul.u32 %v279, 2146121005
    %v296 = vmul.u32 %v280, 2146121005
    %v297 = vmul.u32 %v281, 2146121005
    %v298 = vshrl.u32 %v282, 15
    %v299 = vshrl.u32 %v283, 15
    %v300 = vshrl.u32 %v284, 15
    %v301 = vshrl.u32 %v285, 15
    %v302 = vshrl.u32 %v286, 15
    %v303 = vshrl.u32 %v287, 15
    %v304 = vshrl.u32 %v288, 15
    %v305 = vshrl.u32 %v289, 15
    %v306 = vshrl.u32 %v290, 15
    %v307 = vshrl.u32 %v291, 15
    %v308 = vshrl.u32 %v292, 15
    %v309 = vshrl.u32 %v293, 15
    %v310 = vshrl.u32 %v294, 15
    %v311 = vshrl.u32 %v295, 15
    %v312 = vshrl.u32 %v296, 15
    %v313 = vshrl.u32 %v297, 15
    %v314 = vxor.u32 %v282, %v298
    %v315 = vxor.u32 %v283, %v299
    %v316 = vxor.u32 %v284, %v300
    %v317 = vxor.u32 %v285, %v301
    %v318 = vxor.u32 %v286, %v302
    %v319 = vxor.u32 %v287, %v303
    %v320 = vxor.u32 %v288, %v304
    %v321 = vxor.u32 %v289, %v305
    %v322 = vxor.u32 %v290, %v306
    %v323 = vxor.u32 %v291, %v307
    %v324 = vxor.u32 %v292, %v308
    %v325 = vxor.u32 %v293, %v309
    %v326 = vxor.u32 %v294, %v310
    %v327 = vxor.u32 %v295, %v311
    %v328 = vxor.u32 %v296, %v312
    %v329 = vxor.u32 %v297, %v313
    %v330 = vmul.u32 %v314, 2221713035
    %v331 = vmul.u32 %v315, 2221713035
    %v332 = vmul.u32 %v316, 2221713035
    %v333 = vmul.u32 %v317, 2221713035
    %v334 = vmul.u32 %v318, 2221713035
    %v335 = vmul.u32 %v319, 2221713035
    %v336 = vmul.u32 %v320, 2221713035
    %v337 = vmul.u32 %v321, 2221713035
    %v338 = vmul.u32 %v322, 2221713035
    %v339 = vmul.u32 %v323, 2221713035
    %v340 = vmul.u32 %v324, 2221713035
    %v341 = vmul.u32 %v325, 2221713035
    %v342 = vmul.u32 %v326, 2221713035
    %v343 = vmul.u32 %v327, 2221713035
    %v344 = vmul.u32 %v328, 2221713035
    %v345 = vmul.u32 %v329, 2221713035
    %v346 = vshrl.u32 %v330, 16
    %v347 = vshrl.u32 %v331, 16
    %v348 = vshrl.u32 %v332, 16
    %v349 = vshrl.u32 %v333, 16
    %v350 = vshrl.u32 %v334, 16
    %v351 = vshrl.u32 %v335, 16
    %v352 = vshrl.u32 %v336, 16
    %v353 = vshrl.u32 %v337, 16
    %v354 = vshrl.u32 %v338, 16
    %v355 = vshrl.u32 %v339, 16
    %v356 = vshrl.u32 %v340, 16
    %v357 = vshrl.u32 %v341, 16
    %v358 = vshrl.u32 %v342, 16
    %v359 = vshrl.u32 %v343, 16
    %v360 = vshrl.u32 %v344, 16
    %v361 = vshrl.u32 %v345, 16
    %v362 = vxor.u32 %v330, %v346
    %v363 = vxor.u32 %v331, %v347
    %v364 = vxor.u32 %v332, %v348
    %v365 = vxor.u32 %v333, %v349
    %v366 = vxor.u32 %v334, %v350
    %v367 = vxor.u32 %v335, %v351
    %v368 = vxor.u32 %v336, %v352
    %v369 = vxor.u32 %v337, %v353
    %v370 = vxor.u32 %v338, %v354
    %v371 = vxor.u32 %v339, %v355
    %v372 = vxor.u32 %v340, %v356
    %v373 = vxor.u32 %v341, %v357
    %v374 = vxor.u32 %v342, %v358
    %v375 = vxor.u32 %v343, %v359
    %v376 = vxor.u32 %v344, %v360
    %v377 = vxor.u32 %v345, %v361
    %v378 = vshrl.u32 %v218, 9
    %v379 = vshrl.u32 %v219, 9
    %v380 = vshrl.u32 %v220, 9
    %v381 = vshrl.u32 %v221, 9
    %v382 = vshrl.u32 %v222, 9
    %v383 = vshrl.u32 %v223, 9
    %v384 = vshrl.u32 %v224, 9
    %v385 = vshrl.u32 %v225, 9
    %v386 = vshrl.u32 %v226, 9
    %v387 = vshrl.u32 %v227, 9
    %v388 = vshrl.u32 %v228, 9
    %v389 = vshrl.u32 %v229, 9
    %v390 = vshrl.u32 %v230, 9
    %v391 = vshrl.u32 %v231, 9
    %v392 = vshrl.u32 %v232, 9
    %v393 = vshrl.u32 %v233, 9
    %v394 = vcvt.s32.f32 %v378
    %v395 = vcvt.s32.f32 %v379
    %v396 = vcvt.s32.f32 %v380
    %v397 = vcvt.s32.f32 %v381
    %v398 = vcvt.s32.f32 %v382
    %v399 = vcvt.s32.f32 %v383
    %v400 = vcvt.s32.f32 %v384
    %v401 = vcvt.s32.f32 %v385
    %v402 = vcvt.s32.f32 %v386
    %v403 = vcvt.s32.f32 %v387
    %v404 = vcvt.s32.f32 %v388
    %v405 = vcvt.s32.f32 %v389
    %v406 = vcvt.s32.f32 %v390
    %v407 = vcvt.s32.f32 %v391
    %v408 = vcvt.s32.f32 %v392
    %v409 = vcvt.s32.f32 %v393
    %v410 = vadd.f32 %v394, 1.0
    %v411 = vadd.f32 %v395, 1.0
    %v412 = vadd.f32 %v396, 1.0
    %v413 = vadd.f32 %v397, 1.0
    %v414 = vadd.f32 %v398, 1.0
    %v415 = vadd.f32 %v399, 1.0
    %v416 = vadd.f32 %v400, 1.0
    %v417 = vadd.f32 %v401, 1.0
    %v418 = vadd.f32 %v402, 1.0
    %v419 = vadd.f32 %v403, 1.0
    %v420 = vadd.f32 %v404, 1.0
    %v421 = vadd.f32 %v405, 1.0
    %v422 = vadd.f32 %v406, 1.0
    %v423 = vadd.f32 %v407, 1.0
    %v424 = vadd.f32 %v408, 1.0
    %v425 = vadd.f32 %v409, 1.0
    %v426 = vmul.f32 %v410, 1.1920929e-07
    %v427 = vmul.f32 %v411, 1.1920929e-07
    %v428 = vmul.f32 %v412, 1.1920929e-07
    %v429 = vmul.f32 %v413, 1.1920929e-07
    %v430 = vmul.f32 %v414, 1.1920929e-07
    %v431 = vmul.f32 %v415, 1.1920929e-07
    %v432 = vmul.f32 %v416, 1.1920929e-07
    %v433 = vmul.f32 %v417, 1.1920929e-07
    %v434 = vmul.f32 %v418, 1.1920929e-07
    %v435 = vmul.f32 %v419, 1.1920929e-07
    %v436 = vmul.f32 %v420, 1.1920929e-07
    %v437 = vmul.f32 %v421, 1.1920929e-07
    %v438 = vmul.f32 %v422, 1.1920929e-07
    %v439 = vmul.f32 %v423, 1.1920929e-07
    %v440 = vmul.f32 %v424, 1.1920929e-07
    %v441 = vmul.f32 %v425, 1.1920929e-07
    %v442 = vshrl.u32 %v362, 9
    %v443 = vshrl.u32 %v363, 9
    %v444 = vshrl.u32 %v364, 9
    %v445 = vshrl.u32 %v365, 9
    %v446 = vshrl.u32 %v366, 9
    %v447 = vshrl.u32 %v367, 9
    %v448 = vshrl.u32 %v368, 9
    %v449 = vshrl.u32 %v369, 9
    %v450 = vshrl.u32 %v370, 9
    %v451 = vshrl.u32 %v371, 9
    %v452 = vshrl.u32 %v372, 9
    %v453 = vshrl.u32 %v373, 9
    %v454 = vshrl.u32 %v374, 9
    %v455 = vshrl.u32 %v375, 9
    %v456 = vshrl.u32 %v376, 9
    %v457 = vshrl.u32 %v377, 9
    %v458 = vcvt.s32.f32 %v442
    %v459 = vcvt.s32.f32 %v443
    %v460 = vcvt.s32.f32 %v444
    %v461 = vcvt.s32.f32 %v445
    %v462 = vcvt.s32.f32 %v446
    %v463 = vcvt.s32.f32 %v447
    %v464 = vcvt.s32.f32 %v448
    %v465 = vcvt.s32.f32 %v449
    %v466 = vcvt.s32.f32 %v450
    %v467 = vcvt.s32.f32 %v451
    %v468 = vcvt.s32.f32 %v452
    %v469 = vcvt.s32.f32 %v453
    %v470 = vcvt.s32.f32 %v454
    %v471 = vcvt.s32.f32 %v455
    %v472 = vcvt.s32.f32 %v456
    %v473 = vcvt.s32.f32 %v457
    %v474 = vmul.f32 %v458, 7.490141e-07
    %v475 = vmul.f32 %v459, 7.490141e-07
    %v476 = vmul.f32 %v460, 7.490141e-07
    %v477 = vmul.f32 %v461, 7.490141e-07
    %v478 = vmul.f32 %v462, 7.490141e-07
    %v479 = vmul.f32 %v463, 7.490141e-07
    %v480 = vmul.f32 %v464, 7.490141e-07
    %v481 = vmul.f32 %v465, 7.490141e-07
    %v482 = vmul.f32 %v466, 7.490141e-07
    %v483 = vmul.f32 %v467, 7.490141e-07
    %v484 = vmul.f32 %v468, 7.490141e-07
    %v485 = vmul.f32 %v469, 7.490141e-07
    %v486 = vmul.f32 %v470, 7.490141e-07
    %v487 = vmul.f32 %v471, 7.490141e-07
    %v488 = vmul.f32 %v472, 7.490141e-07
    %v489 = vmul.f32 %v473, 7.490141e-07
    %v490 = vlog2.pop %v426
    %v491 = vmul.f32 %v490, 0.6931472
    %v492 = vlog2.pop %v427
    %v493 = vmul.f32 %v492, 0.6931472
    %v494 = vlog2.pop %v428
    %v495 = vmul.f32 %v494, 0.6931472
    %v496 = vlog2.pop %v429
    %v497 = vmul.f32 %v496, 0.6931472
    %v498 = vlog2.pop %v430
    %v499 = vmul.f32 %v498, 0.6931472
    %v500 = vlog2.pop %v431
    %v501 = vmul.f32 %v500, 0.6931472
    %v502 = vlog2.pop %v432
    %v503 = vmul.f32 %v502, 0.6931472
    %v504 = vlog2.pop %v433
    %v505 = vmul.f32 %v504, 0.6931472
    %v506 = vlog2.pop %v434
    %v507 = vmul.f32 %v506, 0.6931472
    %v508 = vlog2.pop %v435
    %v509 = vmul.f32 %v508, 0.6931472
    %v510 = vlog2.pop %v436
    %v511 = vmul.f32 %v510, 0.6931472
    %v512 = vlog2.pop %v437
    %v513 = vmul.f32 %v512, 0.6931472
    %v514 = vlog2.pop %v438
    %v515 = vmul.f32 %v514, 0.6931472
    %v516 = vlog2.pop %v439
    %v517 = vmul.f32 %v516, 0.6931472
    %v518 = vlog2.pop %v440
    %v519 = vmul.f32 %v518, 0.6931472
    %v520 = vlog2.pop %v441
    %v521 = vmul.f32 %v520, 0.6931472
    %v522 = vmul.f32 %v491, -2.0
    %v523 = vmul.f32 %v493, -2.0
    %v524 = vmul.f32 %v495, -2.0
    %v525 = vmul.f32 %v497, -2.0
    %v526 = vmul.f32 %v499, -2.0
    %v527 = vmul.f32 %v501, -2.0
    %v528 = vmul.f32 %v503, -2.0
    %v529 = vmul.f32 %v505, -2.0
    %v530 = vmul.f32 %v507, -2.0
    %v531 = vmul.f32 %v509, -2.0
    %v532 = vmul.f32 %v511, -2.0
    %v533 = vmul.f32 %v513, -2.0
    %v534 = vmul.f32 %v515, -2.0
    %v535 = vmul.f32 %v517, -2.0
    %v536 = vmul.f32 %v519, -2.0
    %v537 = vmul.f32 %v521, -2.0
    %v538 = vrsqrt.pop %v522
    %v539 = vmul.f32 %v522, %v538
    %vm540 = vcmp.eq.f32.partialorder %v522, inf
    %v541 = vsel %vm540, %v522, %v539
    %vm542 = vcmp.eq.f32.partialorder %v522, 0.0
    %v543 = vand.u32 %v522, 2147483648
    %v544 = vsel %vm542, %v543, %v541
    %v545 = vrsqrt.pop %v523
    %v546 = vmul.f32 %v523, %v545
    %vm547 = vcmp.eq.f32.partialorder %v523, inf
    %v548 = vsel %vm547, %v523, %v546
    %vm549 = vcmp.eq.f32.partialorder %v523, 0.0
    %v550 = vand.u32 %v523, 2147483648
    %v551 = vsel %vm549, %v550, %v548
    %v552 = vrsqrt.pop %v524
    %v553 = vmul.f32 %v524, %v552
    %vm554 = vcmp.eq.f32.partialorder %v524, inf
    %v555 = vsel %vm554, %v524, %v553
    %vm556 = vcmp.eq.f32.partialorder %v524, 0.0
    %v557 = vand.u32 %v524, 2147483648
    %v558 = vsel %vm556, %v557, %v555
    %v559 = vrsqrt.pop %v525
    %v560 = vmul.f32 %v525, %v559
    %vm561 = vcmp.eq.f32.partialorder %v525, inf
    %v562 = vsel %vm561, %v525, %v560
    %vm563 = vcmp.eq.f32.partialorder %v525, 0.0
    %v564 = vand.u32 %v525, 2147483648
    %v565 = vsel %vm563, %v564, %v562
    %v566 = vrsqrt.pop %v526
    %v567 = vmul.f32 %v526, %v566
    %vm568 = vcmp.eq.f32.partialorder %v526, inf
    %v569 = vsel %vm568, %v526, %v567
    %vm570 = vcmp.eq.f32.partialorder %v526, 0.0
    %v571 = vand.u32 %v526, 2147483648
    %v572 = vsel %vm570, %v571, %v569
    %v573 = vrsqrt.pop %v527
    %v574 = vmul.f32 %v527, %v573
    %vm575 = vcmp.eq.f32.partialorder %v527, inf
    %v576 = vsel %vm575, %v527, %v574
    %vm577 = vcmp.eq.f32.partialorder %v527, 0.0
    %v578 = vand.u32 %v527, 2147483648
    %v579 = vsel %vm577, %v578, %v576
    %v580 = vrsqrt.pop %v528
    %v581 = vmul.f32 %v528, %v580
    %vm582 = vcmp.eq.f32.partialorder %v528, inf
    %v583 = vsel %vm582, %v528, %v581
    %vm584 = vcmp.eq.f32.partialorder %v528, 0.0
    %v585 = vand.u32 %v528, 2147483648
    %v586 = vsel %vm584, %v585, %v583
    %v587 = vrsqrt.pop %v529
    %v588 = vmul.f32 %v529, %v587
    %vm589 = vcmp.eq.f32.partialorder %v529, inf
    %v590 = vsel %vm589, %v529, %v588
    %vm591 = vcmp.eq.f32.partialorder %v529, 0.0
    %v592 = vand.u32 %v529, 2147483648
    %v593 = vsel %vm591, %v592, %v590
    %v594 = vrsqrt.pop %v530
    %v595 = vmul.f32 %v530, %v594
    %vm596 = vcmp.eq.f32.partialorder %v530, inf
    %v597 = vsel %vm596, %v530, %v595
    %vm598 = vcmp.eq.f32.partialorder %v530, 0.0
    %v599 = vand.u32 %v530, 2147483648
    %v600 = vsel %vm598, %v599, %v597
    %v601 = vrsqrt.pop %v531
    %v602 = vmul.f32 %v531, %v601
    %vm603 = vcmp.eq.f32.partialorder %v531, inf
    %v604 = vsel %vm603, %v531, %v602
    %vm605 = vcmp.eq.f32.partialorder %v531, 0.0
    %v606 = vand.u32 %v531, 2147483648
    %v607 = vsel %vm605, %v606, %v604
    %v608 = vrsqrt.pop %v532
    %v609 = vmul.f32 %v532, %v608
    %vm610 = vcmp.eq.f32.partialorder %v532, inf
    %v611 = vsel %vm610, %v532, %v609
    %vm612 = vcmp.eq.f32.partialorder %v532, 0.0
    %v613 = vand.u32 %v532, 2147483648
    %v614 = vsel %vm612, %v613, %v611
    %v615 = vrsqrt.pop %v533
    %v616 = vmul.f32 %v533, %v615
    %vm617 = vcmp.eq.f32.partialorder %v533, inf
    %v618 = vsel %vm617, %v533, %v616
    %vm619 = vcmp.eq.f32.partialorder %v533, 0.0
    %v620 = vand.u32 %v533, 2147483648
    %v621 = vsel %vm619, %v620, %v618
    %v622 = vrsqrt.pop %v534
    %v623 = vmul.f32 %v534, %v622
    %vm624 = vcmp.eq.f32.partialorder %v534, inf
    %v625 = vsel %vm624, %v534, %v623
    %vm626 = vcmp.eq.f32.partialorder %v534, 0.0
    %v627 = vand.u32 %v534, 2147483648
    %v628 = vsel %vm626, %v627, %v625
    %v629 = vrsqrt.pop %v535
    %v630 = vmul.f32 %v535, %v629
    %vm631 = vcmp.eq.f32.partialorder %v535, inf
    %v632 = vsel %vm631, %v535, %v630
    %vm633 = vcmp.eq.f32.partialorder %v535, 0.0
    %v634 = vand.u32 %v535, 2147483648
    %v635 = vsel %vm633, %v634, %v632
    %v636 = vrsqrt.pop %v536
    %v637 = vmul.f32 %v536, %v636
    %vm638 = vcmp.eq.f32.partialorder %v536, inf
    %v639 = vsel %vm638, %v536, %v637
    %vm640 = vcmp.eq.f32.partialorder %v536, 0.0
    %v641 = vand.u32 %v536, 2147483648
    %v642 = vsel %vm640, %v641, %v639
    %v643 = vrsqrt.pop %v537
    %v644 = vmul.f32 %v537, %v643
    %vm645 = vcmp.eq.f32.partialorder %v537, inf
    %v646 = vsel %vm645, %v537, %v644
    %vm647 = vcmp.eq.f32.partialorder %v537, 0.0
    %v648 = vand.u32 %v537, 2147483648
    %v649 = vsel %vm647, %v648, %v646
    %v650 = vand.u32 2147483647, %v474
    %vm651 = vcmp.le.f32.partialorder %v650, 0.7853982
    %vm652 = vcmp.lt.s32.totalorder %v474, 0
    %v653 = vand.u32 %v474, 2139095040
    %v654 = vshrl.u32 %v653, 23
    %v655 = vsub.s32 %v654, 127
    %v656 = vand.u32 2147483647, %v474
    %v657 = vand.u32 %v656, 8388607
    %v658 = vor.u32 %v657, 8388608
    %v659 = vsub.s32 0, %v658
    %v660 = vadd.s32 %v655, 1
    %vm661 = vcmp.gt.s32.totalorder %v660, 0
    %v662 = vsel %vm661, %v660, 0
    %v663 = vshrl.u32 %v662, 5
    %v664 = vand.u32 %v662, 31
    %v665 = vsub.s32 32, %v664
    %v666 = vshrl.u32 683565275, %v665
    %v667 = vshll.u32 683565275, %v664
    %v668 = vshrl.u32 2475754826, %v665
    %v669 = vor.u32 %v667, %v668
    %v670 = vshll.u32 2475754826, %v664
    %v671 = vshrl.u32 2131351028, %v665
    %v672 = vor.u32 %v670, %v671
    %v673 = vshll.u32 2131351028, %v664
    %v674 = vshrl.u32 2102212464, %v665
    %v675 = vor.u32 %v673, %v674
    %v676 = vshll.u32 2102212464, %v664
    %v677 = vshrl.u32 920167782, %v665
    %v678 = vor.u32 %v676, %v677
    %v679 = vshll.u32 920167782, %v664
    %v680 = vshrl.u32 1326507024, %v665
    %v681 = vor.u32 %v679, %v680
    %vm682 = vcmp.lt.s32.totalorder %v663, 1
    %vm683 = vcmp.lt.s32.totalorder %v663, 2
    %vm684 = vcmp.lt.s32.totalorder %v663, 3
    %vm685 = vcmp.lt.s32.totalorder %v663, 4
    %v686 = vsel %vm682, %v666, %v669
    %v687 = vsel %vm685, %v675, 2102212464
    %v688 = vsel %vm684, %v672, %v687
    %v689 = vsel %vm683, %v686, %v688
    %v690 = vsel %vm682, %v669, %v672
    %v691 = vsel %vm685, %v678, 920167782
    %v692 = vsel %vm684, %v675, %v691
    %v693 = vsel %vm683, %v690, %v692
    %v694 = vsel %vm682, %v672, %v675
    %v695 = vsel %vm685, %v681, 1326507024
    %v696 = vsel %vm684, %v678, %v695
    %v697 = vsel %vm683, %v694, %v696
    %v698 = vshll.u32 %v658, 8
    %v699 = vmul.u32.u64.compose %v698, %v697
    %v700 = vextract.low.u32 %v699
    %v701 = vextract.high.u32 %v699
    %v702 = vmul.u32.u64.compose %v698, %v693
    %v703 = vextract.low.u32 %v702
    %v704 = vextract.high.u32 %v702
    %v705 = vmul.u32 %v698, %v689
    %v706 = vadd.s32 %v701, %v703
    %vm707 = vc.u32 %v701, %v703
    %v708 = vadd.s32 %v704, 1
    %v709 = vsel %vm707, %v708, %v704
    %v710 = vadd.s32 %v705, %v709
    %v711 = vadd.s32 %v710, 536870912
    %v712 = vshrl.u32 %v711, 30
    %v713 = vshll.u32 %v712, 30
    %v714 = vsub.s32 %v710, %v713
    %vm715 = vcmp.lt.s32.totalorder %v714, 0
    %v716 = vsub.s32 0, %v714
    %v717 = vsel %vm715, %v716, %v714
    %v718 = vclz %v717
    %v719 = vsub.s32 %v718, 2
    %vm720 = vcmp.gt.s32.totalorder 0, %v719
    %v721 = vsel %vm720, 0, %v719
    %v722 = vsub.s32 32, %v721
    %v723 = vshll.u32 %v714, %v721
    %v724 = vshrl.u32 %v706, %v722
    %v725 = vor.u32 %v723, %v724
    %v726 = vsub.s32 4294967266, %v721
    %v727 = vadd.s32 %v726, 127
    %v728 = vshll.u32 %v727, 23
    %v729 = vor.u32 4788187, %v728
    %v730 = vand.u32 2147483647, %v729
    %v732 = vcvt.s32.f32 %v725
    %v733 = vmul.f32 %v732, %v730
    %v734 = vxor.u32 %v733, 2147483648
    %v735 = vsel %vm652, %v734, %v733
    %v736 = vsub.s32 4, %v712
    %v737 = vsel %vm652, %v736, %v712
    %v738 = vsel %vm651, %v474, %v735
    %v739 = vsel %vm651, 0, %v737
    %v740 = vcosq.f32.pop %v738
    %v741 = vsinq.f32.pop %v738
    %vm742 = vweird.f32 %v474
    %v743 = vand.u32 %v739, 3
    %vm744 = vcmp.lt.s32.totalorder %v743, 2
    %vm745 = vcmp.eq.s32.totalorder %v743, 0
    %v746 = vxor.u32 %v741, 2147483648
    %v747 = vsel %vm745, %v740, %v746
    %vm748 = vcmp.eq.s32.totalorder %v743, 2
    %v749 = vxor.u32 %v740, 2147483648
    %v750 = vsel %vm748, %v749, %v741
    %v751 = vsel %vm744, %v747, %v750
    %v752 = vsel %vm742, nan, %v751
    %v753 = vand.u32 2147483647, %v475
    %vm754 = vcmp.le.f32.partialorder %v753, 0.7853982
    %vm755 = vcmp.lt.s32.totalorder %v475, 0
    %v756 = vand.u32 %v475, 2139095040
    %v757 = vshrl.u32 %v756, 23
    %v758 = vsub.s32 %v757, 127
    %v759 = vand.u32 2147483647, %v475
    %v760 = vand.u32 %v759, 8388607
    %v761 = vor.u32 %v760, 8388608
    %v762 = vsub.s32 0, %v761
    %v763 = vadd.s32 %v758, 1
    %vm764 = vcmp.gt.s32.totalorder %v763, 0
    %v765 = vsel %vm764, %v763, 0
    %v766 = vshrl.u32 %v765, 5
    %v767 = vand.u32 %v765, 31
    %v768 = vsub.s32 32, %v767
    %v769 = vshrl.u32 683565275, %v768
    %v770 = vshll.u32 683565275, %v767
    %v771 = vshrl.u32 2475754826, %v768
    %v772 = vor.u32 %v770, %v771
    %v773 = vshll.u32 2475754826, %v767
    %v774 = vshrl.u32 2131351028, %v768
    %v775 = vor.u32 %v773, %v774
    %v776 = vshll.u32 2131351028, %v767
    %v777 = vshrl.u32 2102212464, %v768
    %v778 = vor.u32 %v776, %v777
    %v779 = vshll.u32 2102212464, %v767
    %v780 = vshrl.u32 920167782, %v768
    %v781 = vor.u32 %v779, %v780
    %v782 = vshll.u32 920167782, %v767
    %v783 = vshrl.u32 1326507024, %v768
    %v784 = vor.u32 %v782, %v783
    %vm785 = vcmp.lt.s32.totalorder %v766, 1
    %vm786 = vcmp.lt.s32.totalorder %v766, 2
    %vm787 = vcmp.lt.s32.totalorder %v766, 3
    %vm788 = vcmp.lt.s32.totalorder %v766, 4
    %v789 = vsel %vm785, %v769, %v772
    %v790 = vsel %vm788, %v778, 2102212464
    %v791 = vsel %vm787, %v775, %v790
    %v792 = vsel %vm786, %v789, %v791
    %v793 = vsel %vm785, %v772, %v775
    %v794 = vsel %vm788, %v781, 920167782
    %v795 = vsel %vm787, %v778, %v794
    %v796 = vsel %vm786, %v793, %v795
    %v797 = vsel %vm785, %v775, %v778
    %v798 = vsel %vm788, %v784, 1326507024
    %v799 = vsel %vm787, %v781, %v798
    %v800 = vsel %vm786, %v797, %v799
    %v801 = vshll.u32 %v761, 8
    %v802 = vmul.u32.u64.compose %v801, %v800
    %v803 = vextract.low.u32 %v802
    %v804 = vextract.high.u32 %v802
    %v805 = vmul.u32.u64.compose %v801, %v796
    %v806 = vextract.low.u32 %v805
    %v807 = vextract.high.u32 %v805
    %v808 = vmul.u32 %v801, %v792
    %v809 = vadd.s32 %v804, %v806
    %vm810 = vc.u32 %v804, %v806
    %v811 = vadd.s32 %v807, 1
    %v812 = vsel %vm810, %v811, %v807
    %v813 = vadd.s32 %v808, %v812
    %v814 = vadd.s32 %v813, 536870912
    %v815 = vshrl.u32 %v814, 30
    %v816 = vshll.u32 %v815, 30
    %v817 = vsub.s32 %v813, %v816
    %vm818 = vcmp.lt.s32.totalorder %v817, 0
    %v819 = vsub.s32 0, %v817
    %v820 = vsel %vm818, %v819, %v817
    %v821 = vclz %v820
    %v822 = vsub.s32 %v821, 2
    %vm823 = vcmp.gt.s32.totalorder 0, %v822
    %v824 = vsel %vm823, 0, %v822
    %v825 = vsub.s32 32, %v824
    %v826 = vshll.u32 %v817, %v824
    %v827 = vshrl.u32 %v809, %v825
    %v828 = vor.u32 %v826, %v827
    %v829 = vsub.s32 4294967266, %v824
    %v830 = vadd.s32 %v829, 127
    %v831 = vshll.u32 %v830, 23
    %v832 = vor.u32 4788187, %v831
    %v833 = vand.u32 2147483647, %v832
    %v835 = vcvt.s32.f32 %v828
    %v836 = vmul.f32 %v835, %v833
    %v837 = vxor.u32 %v836, 2147483648
    %v838 = vsel %vm755, %v837, %v836
    %v839 = vsub.s32 4, %v815
    %v840 = vsel %vm755, %v839, %v815
    %v841 = vsel %vm754, %v475, %v838
    %v842 = vsel %vm754, 0, %v840
    %v843 = vcosq.f32.pop %v841
    %v844 = vsinq.f32.pop %v841
    %vm845 = vweird.f32 %v475
    %v846 = vand.u32 %v842, 3
    %vm847 = vcmp.lt.s32.totalorder %v846, 2
    %vm848 = vcmp.eq.s32.totalorder %v846, 0
    %v849 = vxor.u32 %v844, 2147483648
    %v850 = vsel %vm848, %v843, %v849
    %vm851 = vcmp.eq.s32.totalorder %v846, 2
    %v852 = vxor.u32 %v843, 2147483648
    %v853 = vsel %vm851, %v852, %v844
    %v854 = vsel %vm847, %v850, %v853
    %v855 = vsel %vm845, nan, %v854
    %v856 = vand.u32 2147483647, %v476
    %vm857 = vcmp.le.f32.partialorder %v856, 0.7853982
    %vm858 = vcmp.lt.s32.totalorder %v476, 0
    %v859 = vand.u32 %v476, 2139095040
    %v860 = vshrl.u32 %v859, 23
    %v861 = vsub.s32 %v860, 127
    %v862 = vand.u32 2147483647, %v476
    %v863 = vand.u32 %v862, 8388607
    %v864 = vor.u32 %v863, 8388608
    %v865 = vsub.s32 0, %v864
    %v866 = vadd.s32 %v861, 1
    %vm867 = vcmp.gt.s32.totalorder %v866, 0
    %v868 = vsel %vm867, %v866, 0
    %v869 = vshrl.u32 %v868, 5
    %v870 = vand.u32 %v868, 31
    %v871 = vsub.s32 32, %v870
    %v872 = vshrl.u32 683565275, %v871
    %v873 = vshll.u32 683565275, %v870
    %v874 = vshrl.u32 2475754826, %v871
    %v875 = vor.u32 %v873, %v874
    %v876 = vshll.u32 2475754826, %v870
    %v877 = vshrl.u32 2131351028, %v871
    %v878 = vor.u32 %v876, %v877
    %v879 = vshll.u32 2131351028, %v870
    %v880 = vshrl.u32 2102212464, %v871
    %v881 = vor.u32 %v879, %v880
    %v882 = vshll.u32 2102212464, %v870
    %v883 = vshrl.u32 920167782, %v871
    %v884 = vor.u32 %v882, %v883
    %v885 = vshll.u32 920167782, %v870
    %v886 = vshrl.u32 1326507024, %v871
    %v887 = vor.u32 %v885, %v886
    %vm888 = vcmp.lt.s32.totalorder %v869, 1
    %vm889 = vcmp.lt.s32.totalorder %v869, 2
    %vm890 = vcmp.lt.s32.totalorder %v869, 3
    %vm891 = vcmp.lt.s32.totalorder %v869, 4
    %v892 = vsel %vm888, %v872, %v875
    %v893 = vsel %vm891, %v881, 2102212464
    %v894 = vsel %vm890, %v878, %v893
    %v895 = vsel %vm889, %v892, %v894
    %v896 = vsel %vm888, %v875, %v878
    %v897 = vsel %vm891, %v884, 920167782
    %v898 = vsel %vm890, %v881, %v897
    %v899 = vsel %vm889, %v896, %v898
    %v900 = vsel %vm888, %v878, %v881
    %v901 = vsel %vm891, %v887, 1326507024
    %v902 = vsel %vm890, %v884, %v901
    %v903 = vsel %vm889, %v900, %v902
    %v904 = vshll.u32 %v864, 8
    %v905 = vmul.u32.u64.compose %v904, %v903
    %v906 = vextract.low.u32 %v905
    %v907 = vextract.high.u32 %v905
    %v908 = vmul.u32.u64.compose %v904, %v899
    %v909 = vextract.low.u32 %v908
    %v910 = vextract.high.u32 %v908
    %v911 = vmul.u32 %v904, %v895
    %v912 = vadd.s32 %v907, %v909
    %vm913 = vc.u32 %v907, %v909
    %v914 = vadd.s32 %v910, 1
    %v915 = vsel %vm913, %v914, %v910
    %v916 = vadd.s32 %v911, %v915
    %v917 = vadd.s32 %v916, 536870912
    %v918 = vshrl.u32 %v917, 30
    %v919 = vshll.u32 %v918, 30
    %v920 = vsub.s32 %v916, %v919
    %vm921 = vcmp.lt.s32.totalorder %v920, 0
    %v922 = vsub.s32 0, %v920
    %v923 = vsel %vm921, %v922, %v920
    %v924 = vclz %v923
    %v925 = vsub.s32 %v924, 2
    %vm926 = vcmp.gt.s32.totalorder 0, %v925
    %v927 = vsel %vm926, 0, %v925
    %v928 = vsub.s32 32, %v927
    %v929 = vshll.u32 %v920, %v927
    %v930 = vshrl.u32 %v912, %v928
    %v931 = vor.u32 %v929, %v930
    %v932 = vsub.s32 4294967266, %v927
    %v933 = vadd.s32 %v932, 127
    %v934 = vshll.u32 %v933, 23
    %v935 = vor.u32 4788187, %v934
    %v936 = vand.u32 2147483647, %v935
    %v938 = vcvt.s32.f32 %v931
    %v939 = vmul.f32 %v938, %v936
    %v940 = vxor.u32 %v939, 2147483648
    %v941 = vsel %vm858, %v940, %v939
    %v942 = vsub.s32 4, %v918
    %v943 = vsel %vm858, %v942, %v918
    %v944 = vsel %vm857, %v476, %v941
    %v945 = vsel %vm857, 0, %v943
    %v946 = vcosq.f32.pop %v944
    %v947 = vsinq.f32.pop %v944
    %vm948 = vweird.f32 %v476
    %v949 = vand.u32 %v945, 3
    %vm950 = vcmp.lt.s32.totalorder %v949, 2
    %vm951 = vcmp.eq.s32.totalorder %v949, 0
    %v952 = vxor.u32 %v947, 2147483648
    %v953 = vsel %vm951, %v946, %v952
    %vm954 = vcmp.eq.s32.totalorder %v949, 2
    %v955 = vxor.u32 %v946, 2147483648
    %v956 = vsel %vm954, %v955, %v947
    %v957 = vsel %vm950, %v953, %v956
    %v958 = vsel %vm948, nan, %v957
    %v959 = vand.u32 2147483647, %v477
    %vm960 = vcmp.le.f32.partialorder %v959, 0.7853982
    %vm961 = vcmp.lt.s32.totalorder %v477, 0
    %v962 = vand.u32 %v477, 2139095040
    %v963 = vshrl.u32 %v962, 23
    %v964 = vsub.s32 %v963, 127
    %v965 = vand.u32 2147483647, %v477
    %v966 = vand.u32 %v965, 8388607
    %v967 = vor.u32 %v966, 8388608
    %v968 = vsub.s32 0, %v967
    %v969 = vadd.s32 %v964, 1
    %vm970 = vcmp.gt.s32.totalorder %v969, 0
    %v971 = vsel %vm970, %v969, 0
    %v972 = vshrl.u32 %v971, 5
    %v973 = vand.u32 %v971, 31
    %v974 = vsub.s32 32, %v973
    %v975 = vshrl.u32 683565275, %v974
    %v976 = vshll.u32 683565275, %v973
    %v977 = vshrl.u32 2475754826, %v974
    %v978 = vor.u32 %v976, %v977
    %v979 = vshll.u32 2475754826, %v973
    %v980 = vshrl.u32 2131351028, %v974
    %v981 = vor.u32 %v979, %v980
    %v982 = vshll.u32 2131351028, %v973
    %v983 = vshrl.u32 2102212464, %v974
    %v984 = vor.u32 %v982, %v983
    %v985 = vshll.u32 2102212464, %v973
    %v986 = vshrl.u32 920167782, %v974
    %v987 = vor.u32 %v985, %v986
    %v988 = vshll.u32 920167782, %v973
    %v989 = vshrl.u32 1326507024, %v974
    %v990 = vor.u32 %v988, %v989
    %vm991 = vcmp.lt.s32.totalorder %v972, 1
    %vm992 = vcmp.lt.s32.totalorder %v972, 2
    %vm993 = vcmp.lt.s32.totalorder %v972, 3
    %vm994 = vcmp.lt.s32.totalorder %v972, 4
    %v995 = vsel %vm991, %v975, %v978
    %v996 = vsel %vm994, %v984, 2102212464
    %v997 = vsel %vm993, %v981, %v996
    %v998 = vsel %vm992, %v995, %v997
    %v999 = vsel %vm991, %v978, %v981
    %v1000 = vsel %vm994, %v987, 920167782
    %v1001 = vsel %vm993, %v984, %v1000
    %v1002 = vsel %vm992, %v999, %v1001
    %v1003 = vsel %vm991, %v981, %v984
    %v1004 = vsel %vm994, %v990, 1326507024
    %v1005 = vsel %vm993, %v987, %v1004
    %v1006 = vsel %vm992, %v1003, %v1005
    %v1007 = vshll.u32 %v967, 8
    %v1008 = vmul.u32.u64.compose %v1007, %v1006
    %v1009 = vextract.low.u32 %v1008
    %v1010 = vextract.high.u32 %v1008
    %v1011 = vmul.u32.u64.compose %v1007, %v1002
    %v1012 = vextract.low.u32 %v1011
    %v1013 = vextract.high.u32 %v1011
    %v1014 = vmul.u32 %v1007, %v998
    %v1015 = vadd.s32 %v1010, %v1012
    %vm1016 = vc.u32 %v1010, %v1012
    %v1017 = vadd.s32 %v1013, 1
    %v1018 = vsel %vm1016, %v1017, %v1013
    %v1019 = vadd.s32 %v1014, %v1018
    %v1020 = vadd.s32 %v1019, 536870912
    %v1021 = vshrl.u32 %v1020, 30
    %v1022 = vshll.u32 %v1021, 30
    %v1023 = vsub.s32 %v1019, %v1022
    %vm1024 = vcmp.lt.s32.totalorder %v1023, 0
    %v1025 = vsub.s32 0, %v1023
    %v1026 = vsel %vm1024, %v1025, %v1023
    %v1027 = vclz %v1026
    %v1028 = vsub.s32 %v1027, 2
    %vm1029 = vcmp.gt.s32.totalorder 0, %v1028
    %v1030 = vsel %vm1029, 0, %v1028
    %v1031 = vsub.s32 32, %v1030
    %v1032 = vshll.u32 %v1023, %v1030
    %v1033 = vshrl.u32 %v1015, %v1031
    %v1034 = vor.u32 %v1032, %v1033
    %v1035 = vsub.s32 4294967266, %v1030
    %v1036 = vadd.s32 %v1035, 127
    %v1037 = vshll.u32 %v1036, 23
    %v1038 = vor.u32 4788187, %v1037
    %v1039 = vand.u32 2147483647, %v1038
    %v1041 = vcvt.s32.f32 %v1034
    %v1042 = vmul.f32 %v1041, %v1039
    %v1043 = vxor.u32 %v1042, 2147483648
    %v1044 = vsel %vm961, %v1043, %v1042
    %v1045 = vsub.s32 4, %v1021
    %v1046 = vsel %vm961, %v1045, %v1021
    %v1047 = vsel %vm960, %v477, %v1044
    %v1048 = vsel %vm960, 0, %v1046
    %v1049 = vcosq.f32.pop %v1047
    %v1050 = vsinq.f32.pop %v1047
    %vm1051 = vweird.f32 %v477
    %v1052 = vand.u32 %v1048, 3
    %vm1053 = vcmp.lt.s32.totalorder %v1052, 2
    %vm1054 = vcmp.eq.s32.totalorder %v1052, 0
    %v1055 = vxor.u32 %v1050, 2147483648
    %v1056 = vsel %vm1054, %v1049, %v1055
    %vm1057 = vcmp.eq.s32.totalorder %v1052, 2
    %v1058 = vxor.u32 %v1049, 2147483648
    %v1059 = vsel %vm1057, %v1058, %v1050
    %v1060 = vsel %vm1053, %v1056, %v1059
    %v1061 = vsel %vm1051, nan, %v1060
    %v1062 = vand.u32 2147483647, %v478
    %vm1063 = vcmp.le.f32.partialorder %v1062, 0.7853982
    %vm1064 = vcmp.lt.s32.totalorder %v478, 0
    %v1065 = vand.u32 %v478, 2139095040
    %v1066 = vshrl.u32 %v1065, 23
    %v1067 = vsub.s32 %v1066, 127
    %v1068 = vand.u32 2147483647, %v478
    %v1069 = vand.u32 %v1068, 8388607
    %v1070 = vor.u32 %v1069, 8388608
    %v1071 = vsub.s32 0, %v1070
    %v1072 = vadd.s32 %v1067, 1
    %vm1073 = vcmp.gt.s32.totalorder %v1072, 0
    %v1074 = vsel %vm1073, %v1072, 0
    %v1075 = vshrl.u32 %v1074, 5
    %v1076 = vand.u32 %v1074, 31
    %v1077 = vsub.s32 32, %v1076
    %v1078 = vshrl.u32 683565275, %v1077
    %v1079 = vshll.u32 683565275, %v1076
    %v1080 = vshrl.u32 2475754826, %v1077
    %v1081 = vor.u32 %v1079, %v1080
    %v1082 = vshll.u32 2475754826, %v1076
    %v1083 = vshrl.u32 2131351028, %v1077
    %v1084 = vor.u32 %v1082, %v1083
    %v1085 = vshll.u32 2131351028, %v1076
    %v1086 = vshrl.u32 2102212464, %v1077
    %v1087 = vor.u32 %v1085, %v1086
    %v1088 = vshll.u32 2102212464, %v1076
    %v1089 = vshrl.u32 920167782, %v1077
    %v1090 = vor.u32 %v1088, %v1089
    %v1091 = vshll.u32 920167782, %v1076
    %v1092 = vshrl.u32 1326507024, %v1077
    %v1093 = vor.u32 %v1091, %v1092
    %vm1094 = vcmp.lt.s32.totalorder %v1075, 1
    %vm1095 = vcmp.lt.s32.totalorder %v1075, 2
    %vm1096 = vcmp.lt.s32.totalorder %v1075, 3
    %vm1097 = vcmp.lt.s32.totalorder %v1075, 4
    %v1098 = vsel %vm1094, %v1078, %v1081
    %v1099 = vsel %vm1097, %v1087, 2102212464
    %v1100 = vsel %vm1096, %v1084, %v1099
    %v1101 = vsel %vm1095, %v1098, %v1100
    %v1102 = vsel %vm1094, %v1081, %v1084
    %v1103 = vsel %vm1097, %v1090, 920167782
    %v1104 = vsel %vm1096, %v1087, %v1103
    %v1105 = vsel %vm1095, %v1102, %v1104
    %v1106 = vsel %vm1094, %v1084, %v1087
    %v1107 = vsel %vm1097, %v1093, 1326507024
    %v1108 = vsel %vm1096, %v1090, %v1107
    %v1109 = vsel %vm1095, %v1106, %v1108
    %v1110 = vshll.u32 %v1070, 8
    %v1111 = vmul.u32.u64.compose %v1110, %v1109
    %v1112 = vextract.low.u32 %v1111
    %v1113 = vextract.high.u32 %v1111
    %v1114 = vmul.u32.u64.compose %v1110, %v1105
    %v1115 = vextract.low.u32 %v1114
    %v1116 = vextract.high.u32 %v1114
    %v1117 = vmul.u32 %v1110, %v1101
    %v1118 = vadd.s32 %v1113, %v1115
    %vm1119 = vc.u32 %v1113, %v1115
    %v1120 = vadd.s32 %v1116, 1
    %v1121 = vsel %vm1119, %v1120, %v1116
    %v1122 = vadd.s32 %v1117, %v1121
    %v1123 = vadd.s32 %v1122, 536870912
    %v1124 = vshrl.u32 %v1123, 30
    %v1125 = vshll.u32 %v1124, 30
    %v1126 = vsub.s32 %v1122, %v1125
    %vm1127 = vcmp.lt.s32.totalorder %v1126, 0
    %v1128 = vsub.s32 0, %v1126
    %v1129 = vsel %vm1127, %v1128, %v1126
    %v1130 = vclz %v1129
    %v1131 = vsub.s32 %v1130, 2
    %vm1132 = vcmp.gt.s32.totalorder 0, %v1131
    %v1133 = vsel %vm1132, 0, %v1131
    %v1134 = vsub.s32 32, %v1133
    %v1135 = vshll.u32 %v1126, %v1133
    %v1136 = vshrl.u32 %v1118, %v1134
    %v1137 = vor.u32 %v1135, %v1136
    %v1138 = vsub.s32 4294967266, %v1133
    %v1139 = vadd.s32 %v1138, 127
    %v1140 = vshll.u32 %v1139, 23
    %v1141 = vor.u32 4788187, %v1140
    %v1142 = vand.u32 2147483647, %v1141
    %v1144 = vcvt.s32.f32 %v1137
    %v1145 = vmul.f32 %v1144, %v1142
    %v1146 = vxor.u32 %v1145, 2147483648
    %v1147 = vsel %vm1064, %v1146, %v1145
    %v1148 = vsub.s32 4, %v1124
    %v1149 = vsel %vm1064, %v1148, %v1124
    %v1150 = vsel %vm1063, %v478, %v1147
    %v1151 = vsel %vm1063, 0, %v1149
    %v1152 = vcosq.f32.pop %v1150
    %v1153 = vsinq.f32.pop %v1150
    %vm1154 = vweird.f32 %v478
    %v1155 = vand.u32 %v1151, 3
    %vm1156 = vcmp.lt.s32.totalorder %v1155, 2
    %vm1157 = vcmp.eq.s32.totalorder %v1155, 0
    %v1158 = vxor.u32 %v1153, 2147483648
    %v1159 = vsel %vm1157, %v1152, %v1158
    %vm1160 = vcmp.eq.s32.totalorder %v1155, 2
    %v1161 = vxor.u32 %v1152, 2147483648
    %v1162 = vsel %vm1160, %v1161, %v1153
    %v1163 = vsel %vm1156, %v1159, %v1162
    %v1164 = vsel %vm1154, nan, %v1163
    %v1165 = vand.u32 2147483647, %v479
    %vm1166 = vcmp.le.f32.partialorder %v1165, 0.7853982
    %vm1167 = vcmp.lt.s32.totalorder %v479, 0
    %v1168 = vand.u32 %v479, 2139095040
    %v1169 = vshrl.u32 %v1168, 23
    %v1170 = vsub.s32 %v1169, 127
    %v1171 = vand.u32 2147483647, %v479
    %v1172 = vand.u32 %v1171, 8388607
    %v1173 = vor.u32 %v1172, 8388608
    %v1174 = vsub.s32 0, %v1173
    %v1175 = vadd.s32 %v1170, 1
    %vm1176 = vcmp.gt.s32.totalorder %v1175, 0
    %v1177 = vsel %vm1176, %v1175, 0
    %v1178 = vshrl.u32 %v1177, 5
    %v1179 = vand.u32 %v1177, 31
    %v1180 = vsub.s32 32, %v1179
    %v1181 = vshrl.u32 683565275, %v1180
    %v1182 = vshll.u32 683565275, %v1179
    %v1183 = vshrl.u32 2475754826, %v1180
    %v1184 = vor.u32 %v1182, %v1183
    %v1185 = vshll.u32 2475754826, %v1179
    %v1186 = vshrl.u32 2131351028, %v1180
    %v1187 = vor.u32 %v1185, %v1186
    %v1188 = vshll.u32 2131351028, %v1179
    %v1189 = vshrl.u32 2102212464, %v1180
    %v1190 = vor.u32 %v1188, %v1189
    %v1191 = vshll.u32 2102212464, %v1179
    %v1192 = vshrl.u32 920167782, %v1180
    %v1193 = vor.u32 %v1191, %v1192
    %v1194 = vshll.u32 920167782, %v1179
    %v1195 = vshrl.u32 1326507024, %v1180
    %v1196 = vor.u32 %v1194, %v1195
    %vm1197 = vcmp.lt.s32.totalorder %v1178, 1
    %vm1198 = vcmp.lt.s32.totalorder %v1178, 2
    %vm1199 = vcmp.lt.s32.totalorder %v1178, 3
    %vm1200 = vcmp.lt.s32.totalorder %v1178, 4
    %v1201 = vsel %vm1197, %v1181, %v1184
    %v1202 = vsel %vm1200, %v1190, 2102212464
    %v1203 = vsel %vm1199, %v1187, %v1202
    %v1204 = vsel %vm1198, %v1201, %v1203
    %v1205 = vsel %vm1197, %v1184, %v1187
    %v1206 = vsel %vm1200, %v1193, 920167782
    %v1207 = vsel %vm1199, %v1190, %v1206
    %v1208 = vsel %vm1198, %v1205, %v1207
    %v1209 = vsel %vm1197, %v1187, %v1190
    %v1210 = vsel %vm1200, %v1196, 1326507024
    %v1211 = vsel %vm1199, %v1193, %v1210
    %v1212 = vsel %vm1198, %v1209, %v1211
    %v1213 = vshll.u32 %v1173, 8
    %v1214 = vmul.u32.u64.compose %v1213, %v1212
    %v1215 = vextract.low.u32 %v1214
    %v1216 = vextract.high.u32 %v1214
    %v1217 = vmul.u32.u64.compose %v1213, %v1208
    %v1218 = vextract.low.u32 %v1217
    %v1219 = vextract.high.u32 %v1217
    %v1220 = vmul.u32 %v1213, %v1204
    %v1221 = vadd.s32 %v1216, %v1218
    %vm1222 = vc.u32 %v1216, %v1218
    %v1223 = vadd.s32 %v1219, 1
    %v1224 = vsel %vm1222, %v1223, %v1219
    %v1225 = vadd.s32 %v1220, %v1224
    %v1226 = vadd.s32 %v1225, 536870912
    %v1227 = vshrl.u32 %v1226, 30
    %v1228 = vshll.u32 %v1227, 30
    %v1229 = vsub.s32 %v1225, %v1228
    %vm1230 = vcmp.lt.s32.totalorder %v1229, 0
    %v1231 = vsub.s32 0, %v1229
    %v1232 = vsel %vm1230, %v1231, %v1229
    %v1233 = vclz %v1232
    %v1234 = vsub.s32 %v1233, 2
    %vm1235 = vcmp.gt.s32.totalorder 0, %v1234
    %v1236 = vsel %vm1235, 0, %v1234
    %v1237 = vsub.s32 32, %v1236
    %v1238 = vshll.u32 %v1229, %v1236
    %v1239 = vshrl.u32 %v1221, %v1237
    %v1240 = vor.u32 %v1238, %v1239
    %v1241 = vsub.s32 4294967266, %v1236
    %v1242 = vadd.s32 %v1241, 127
    %v1243 = vshll.u32 %v1242, 23
    %v1244 = vor.u32 4788187, %v1243
    %v1245 = vand.u32 2147483647, %v1244
    %v1247 = vcvt.s32.f32 %v1240
    %v1248 = vmul.f32 %v1247, %v1245
    %v1249 = vxor.u32 %v1248, 2147483648
    %v1250 = vsel %vm1167, %v1249, %v1248
    %v1251 = vsub.s32 4, %v1227
    %v1252 = vsel %vm1167, %v1251, %v1227
    %v1253 = vsel %vm1166, %v479, %v1250
    %v1254 = vsel %vm1166, 0, %v1252
    %v1255 = vcosq.f32.pop %v1253
    %v1256 = vsinq.f32.pop %v1253
    %vm1257 = vweird.f32 %v479
    %v1258 = vand.u32 %v1254, 3
    %vm1259 = vcmp.lt.s32.totalorder %v1258, 2
    %vm1260 = vcmp.eq.s32.totalorder %v1258, 0
    %v1261 = vxor.u32 %v1256, 2147483648
    %v1262 = vsel %vm1260, %v1255, %v1261
    %vm1263 = vcmp.eq.s32.totalorder %v1258, 2
    %v1264 = vxor.u32 %v1255, 2147483648
    %v1265 = vsel %vm1263, %v1264, %v1256
    %v1266 = vsel %vm1259, %v1262, %v1265
    %v1267 = vsel %vm1257, nan, %v1266
    %v1268 = vand.u32 2147483647, %v480
    %vm1269 = vcmp.le.f32.partialorder %v1268, 0.7853982
    %vm1270 = vcmp.lt.s32.totalorder %v480, 0
    %v1271 = vand.u32 %v480, 2139095040
    %v1272 = vshrl.u32 %v1271, 23
    %v1273 = vsub.s32 %v1272, 127
    %v1274 = vand.u32 2147483647, %v480
    %v1275 = vand.u32 %v1274, 8388607
    %v1276 = vor.u32 %v1275, 8388608
    %v1277 = vsub.s32 0, %v1276
    %v1278 = vadd.s32 %v1273, 1
    %vm1279 = vcmp.gt.s32.totalorder %v1278, 0
    %v1280 = vsel %vm1279, %v1278, 0
    %v1281 = vshrl.u32 %v1280, 5
    %v1282 = vand.u32 %v1280, 31
    %v1283 = vsub.s32 32, %v1282
    %v1284 = vshrl.u32 683565275, %v1283
    %v1285 = vshll.u32 683565275, %v1282
    %v1286 = vshrl.u32 2475754826, %v1283
    %v1287 = vor.u32 %v1285, %v1286
    %v1288 = vshll.u32 2475754826, %v1282
    %v1289 = vshrl.u32 2131351028, %v1283
    %v1290 = vor.u32 %v1288, %v1289
    %v1291 = vshll.u32 2131351028, %v1282
    %v1292 = vshrl.u32 2102212464, %v1283
    %v1293 = vor.u32 %v1291, %v1292
    %v1294 = vshll.u32 2102212464, %v1282
    %v1295 = vshrl.u32 920167782, %v1283
    %v1296 = vor.u32 %v1294, %v1295
    %v1297 = vshll.u32 920167782, %v1282
    %v1298 = vshrl.u32 1326507024, %v1283
    %v1299 = vor.u32 %v1297, %v1298
    %vm1300 = vcmp.lt.s32.totalorder %v1281, 1
    %vm1301 = vcmp.lt.s32.totalorder %v1281, 2
    %vm1302 = vcmp.lt.s32.totalorder %v1281, 3
    %vm1303 = vcmp.lt.s32.totalorder %v1281, 4
    %v1304 = vsel %vm1300, %v1284, %v1287
    %v1305 = vsel %vm1303, %v1293, 2102212464
    %v1306 = vsel %vm1302, %v1290, %v1305
    %v1307 = vsel %vm1301, %v1304, %v1306
    %v1308 = vsel %vm1300, %v1287, %v1290
    %v1309 = vsel %vm1303, %v1296, 920167782
    %v1310 = vsel %vm1302, %v1293, %v1309
    %v1311 = vsel %vm1301, %v1308, %v1310
    %v1312 = vsel %vm1300, %v1290, %v1293
    %v1313 = vsel %vm1303, %v1299, 1326507024
    %v1314 = vsel %vm1302, %v1296, %v1313
    %v1315 = vsel %vm1301, %v1312, %v1314
    %v1316 = vshll.u32 %v1276, 8
    %v1317 = vmul.u32.u64.compose %v1316, %v1315
    %v1318 = vextract.low.u32 %v1317
    %v1319 = vextract.high.u32 %v1317
    %v1320 = vmul.u32.u64.compose %v1316, %v1311
    %v1321 = vextract.low.u32 %v1320
    %v1322 = vextract.high.u32 %v1320
    %v1323 = vmul.u32 %v1316, %v1307
    %v1324 = vadd.s32 %v1319, %v1321
    %vm1325 = vc.u32 %v1319, %v1321
    %v1326 = vadd.s32 %v1322, 1
    %v1327 = vsel %vm1325, %v1326, %v1322
    %v1328 = vadd.s32 %v1323, %v1327
    %v1329 = vadd.s32 %v1328, 536870912
    %v1330 = vshrl.u32 %v1329, 30
    %v1331 = vshll.u32 %v1330, 30
    %v1332 = vsub.s32 %v1328, %v1331
    %vm1333 = vcmp.lt.s32.totalorder %v1332, 0
    %v1334 = vsub.s32 0, %v1332
    %v1335 = vsel %vm1333, %v1334, %v1332
    %v1336 = vclz %v1335
    %v1337 = vsub.s32 %v1336, 2
    %vm1338 = vcmp.gt.s32.totalorder 0, %v1337
    %v1339 = vsel %vm1338, 0, %v1337
    %v1340 = vsub.s32 32, %v1339
    %v1341 = vshll.u32 %v1332, %v1339
    %v1342 = vshrl.u32 %v1324, %v1340
    %v1343 = vor.u32 %v1341, %v1342
    %v1344 = vsub.s32 4294967266, %v1339
    %v1345 = vadd.s32 %v1344, 127
    %v1346 = vshll.u32 %v1345, 23
    %v1347 = vor.u32 4788187, %v1346
    %v1348 = vand.u32 2147483647, %v1347
    %v1350 = vcvt.s32.f32 %v1343
    %v1351 = vmul.f32 %v1350, %v1348
    %v1352 = vxor.u32 %v1351, 2147483648
    %v1353 = vsel %vm1270, %v1352, %v1351
    %v1354 = vsub.s32 4, %v1330
    %v1355 = vsel %vm1270, %v1354, %v1330
    %v1356 = vsel %vm1269, %v480, %v1353
    %v1357 = vsel %vm1269, 0, %v1355
    %v1358 = vcosq.f32.pop %v1356
    %v1359 = vsinq.f32.pop %v1356
    %vm1360 = vweird.f32 %v480
    %v1361 = vand.u32 %v1357, 3
    %vm1362 = vcmp.lt.s32.totalorder %v1361, 2
    %vm1363 = vcmp.eq.s32.totalorder %v1361, 0
    %v1364 = vxor.u32 %v1359, 2147483648
    %v1365 = vsel %vm1363, %v1358, %v1364
    %vm1366 = vcmp.eq.s32.totalorder %v1361, 2
    %v1367 = vxor.u32 %v1358, 2147483648
    %v1368 = vsel %vm1366, %v1367, %v1359
    %v1369 = vsel %vm1362, %v1365, %v1368
    %v1370 = vsel %vm1360, nan, %v1369
    %v1371 = vand.u32 2147483647, %v481
    %vm1372 = vcmp.le.f32.partialorder %v1371, 0.7853982
    %vm1373 = vcmp.lt.s32.totalorder %v481, 0
    %v1374 = vand.u32 %v481, 2139095040
    %v1375 = vshrl.u32 %v1374, 23
    %v1376 = vsub.s32 %v1375, 127
    %v1377 = vand.u32 2147483647, %v481
    %v1378 = vand.u32 %v1377, 8388607
    %v1379 = vor.u32 %v1378, 8388608
    %v1380 = vsub.s32 0, %v1379
    %v1381 = vadd.s32 %v1376, 1
    %vm1382 = vcmp.gt.s32.totalorder %v1381, 0
    %v1383 = vsel %vm1382, %v1381, 0
    %v1384 = vshrl.u32 %v1383, 5
    %v1385 = vand.u32 %v1383, 31
    %v1386 = vsub.s32 32, %v1385
    %v1387 = vshrl.u32 683565275, %v1386
    %v1388 = vshll.u32 683565275, %v1385
    %v1389 = vshrl.u32 2475754826, %v1386
    %v1390 = vor.u32 %v1388, %v1389
    %v1391 = vshll.u32 2475754826, %v1385
    %v1392 = vshrl.u32 2131351028, %v1386
    %v1393 = vor.u32 %v1391, %v1392
    %v1394 = vshll.u32 2131351028, %v1385
    %v1395 = vshrl.u32 2102212464, %v1386
    %v1396 = vor.u32 %v1394, %v1395
    %v1397 = vshll.u32 2102212464, %v1385
    %v1398 = vshrl.u32 920167782, %v1386
    %v1399 = vor.u32 %v1397, %v1398
    %v1400 = vshll.u32 920167782, %v1385
    %v1401 = vshrl.u32 1326507024, %v1386
    %v1402 = vor.u32 %v1400, %v1401
    %vm1403 = vcmp.lt.s32.totalorder %v1384, 1
    %vm1404 = vcmp.lt.s32.totalorder %v1384, 2
    %vm1405 = vcmp.lt.s32.totalorder %v1384, 3
    %vm1406 = vcmp.lt.s32.totalorder %v1384, 4
    %v1407 = vsel %vm1403, %v1387, %v1390
    %v1408 = vsel %vm1406, %v1396, 2102212464
    %v1409 = vsel %vm1405, %v1393, %v1408
    %v1410 = vsel %vm1404, %v1407, %v1409
    %v1411 = vsel %vm1403, %v1390, %v1393
    %v1412 = vsel %vm1406, %v1399, 920167782
    %v1413 = vsel %vm1405, %v1396, %v1412
    %v1414 = vsel %vm1404, %v1411, %v1413
    %v1415 = vsel %vm1403, %v1393, %v1396
    %v1416 = vsel %vm1406, %v1402, 1326507024
    %v1417 = vsel %vm1405, %v1399, %v1416
    %v1418 = vsel %vm1404, %v1415, %v1417
    %v1419 = vshll.u32 %v1379, 8
    %v1420 = vmul.u32.u64.compose %v1419, %v1418
    %v1421 = vextract.low.u32 %v1420
    %v1422 = vextract.high.u32 %v1420
    %v1423 = vmul.u32.u64.compose %v1419, %v1414
    %v1424 = vextract.low.u32 %v1423
    %v1425 = vextract.high.u32 %v1423
    %v1426 = vmul.u32 %v1419, %v1410
    %v1427 = vadd.s32 %v1422, %v1424
    %vm1428 = vc.u32 %v1422, %v1424
    %v1429 = vadd.s32 %v1425, 1
    %v1430 = vsel %vm1428, %v1429, %v1425
    %v1431 = vadd.s32 %v1426, %v1430
    %v1432 = vadd.s32 %v1431, 536870912
    %v1433 = vshrl.u32 %v1432, 30
    %v1434 = vshll.u32 %v1433, 30
    %v1435 = vsub.s32 %v1431, %v1434
    %vm1436 = vcmp.lt.s32.totalorder %v1435, 0
    %v1437 = vsub.s32 0, %v1435
    %v1438 = vsel %vm1436, %v1437, %v1435
    %v1439 = vclz %v1438
    %v1440 = vsub.s32 %v1439, 2
    %vm1441 = vcmp.gt.s32.totalorder 0, %v1440
    %v1442 = vsel %vm1441, 0, %v1440
    %v1443 = vsub.s32 32, %v1442
    %v1444 = vshll.u32 %v1435, %v1442
    %v1445 = vshrl.u32 %v1427, %v1443
    %v1446 = vor.u32 %v1444, %v1445
    %v1447 = vsub.s32 4294967266, %v1442
    %v1448 = vadd.s32 %v1447, 127
    %v1449 = vshll.u32 %v1448, 23
    %v1450 = vor.u32 4788187, %v1449
    %v1451 = vand.u32 2147483647, %v1450
    %v1453 = vcvt.s32.f32 %v1446
    %v1454 = vmul.f32 %v1453, %v1451
    %v1455 = vxor.u32 %v1454, 2147483648
    %v1456 = vsel %vm1373, %v1455, %v1454
    %v1457 = vsub.s32 4, %v1433
    %v1458 = vsel %vm1373, %v1457, %v1433
    %v1459 = vsel %vm1372, %v481, %v1456
    %v1460 = vsel %vm1372, 0, %v1458
    %v1461 = vcosq.f32.pop %v1459
    %v1462 = vsinq.f32.pop %v1459
    %vm1463 = vweird.f32 %v481
    %v1464 = vand.u32 %v1460, 3
    %vm1465 = vcmp.lt.s32.totalorder %v1464, 2
    %vm1466 = vcmp.eq.s32.totalorder %v1464, 0
    %v1467 = vxor.u32 %v1462, 2147483648
    %v1468 = vsel %vm1466, %v1461, %v1467
    %vm1469 = vcmp.eq.s32.totalorder %v1464, 2
    %v1470 = vxor.u32 %v1461, 2147483648
    %v1471 = vsel %vm1469, %v1470, %v1462
    %v1472 = vsel %vm1465, %v1468, %v1471
    %v1473 = vsel %vm1463, nan, %v1472
    %v1474 = vand.u32 2147483647, %v482
    %vm1475 = vcmp.le.f32.partialorder %v1474, 0.7853982
    %vm1476 = vcmp.lt.s32.totalorder %v482, 0
    %v1477 = vand.u32 %v482, 2139095040
    %v1478 = vshrl.u32 %v1477, 23
    %v1479 = vsub.s32 %v1478, 127
    %v1480 = vand.u32 2147483647, %v482
    %v1481 = vand.u32 %v1480, 8388607
    %v1482 = vor.u32 %v1481, 8388608
    %v1483 = vsub.s32 0, %v1482
    %v1484 = vadd.s32 %v1479, 1
    %vm1485 = vcmp.gt.s32.totalorder %v1484, 0
    %v1486 = vsel %vm1485, %v1484, 0
    %v1487 = vshrl.u32 %v1486, 5
    %v1488 = vand.u32 %v1486, 31
    %v1489 = vsub.s32 32, %v1488
    %v1490 = vshrl.u32 683565275, %v1489
    %v1491 = vshll.u32 683565275, %v1488
    %v1492 = vshrl.u32 2475754826, %v1489
    %v1493 = vor.u32 %v1491, %v1492
    %v1494 = vshll.u32 2475754826, %v1488
    %v1495 = vshrl.u32 2131351028, %v1489
    %v1496 = vor.u32 %v1494, %v1495
    %v1497 = vshll.u32 2131351028, %v1488
    %v1498 = vshrl.u32 2102212464, %v1489
    %v1499 = vor.u32 %v1497, %v1498
    %v1500 = vshll.u32 2102212464, %v1488
    %v1501 = vshrl.u32 920167782, %v1489
    %v1502 = vor.u32 %v1500, %v1501
    %v1503 = vshll.u32 920167782, %v1488
    %v1504 = vshrl.u32 1326507024, %v1489
    %v1505 = vor.u32 %v1503, %v1504
    %vm1506 = vcmp.lt.s32.totalorder %v1487, 1
    %vm1507 = vcmp.lt.s32.totalorder %v1487, 2
    %vm1508 = vcmp.lt.s32.totalorder %v1487, 3
    %vm1509 = vcmp.lt.s32.totalorder %v1487, 4
    %v1510 = vsel %vm1506, %v1490, %v1493
    %v1511 = vsel %vm1509, %v1499, 2102212464
    %v1512 = vsel %vm1508, %v1496, %v1511
    %v1513 = vsel %vm1507, %v1510, %v1512
    %v1514 = vsel %vm1506, %v1493, %v1496
    %v1515 = vsel %vm1509, %v1502, 920167782
    %v1516 = vsel %vm1508, %v1499, %v1515
    %v1517 = vsel %vm1507, %v1514, %v1516
    %v1518 = vsel %vm1506, %v1496, %v1499
    %v1519 = vsel %vm1509, %v1505, 1326507024
    %v1520 = vsel %vm1508, %v1502, %v1519
    %v1521 = vsel %vm1507, %v1518, %v1520
    %v1522 = vshll.u32 %v1482, 8
    %v1523 = vmul.u32.u64.compose %v1522, %v1521
    %v1524 = vextract.low.u32 %v1523
    %v1525 = vextract.high.u32 %v1523
    %v1526 = vmul.u32.u64.compose %v1522, %v1517
    %v1527 = vextract.low.u32 %v1526
    %v1528 = vextract.high.u32 %v1526
    %v1529 = vmul.u32 %v1522, %v1513
    %v1530 = vadd.s32 %v1525, %v1527
    %vm1531 = vc.u32 %v1525, %v1527
    %v1532 = vadd.s32 %v1528, 1
    %v1533 = vsel %vm1531, %v1532, %v1528
    %v1534 = vadd.s32 %v1529, %v1533
    %v1535 = vadd.s32 %v1534, 536870912
    %v1536 = vshrl.u32 %v1535, 30
    %v1537 = vshll.u32 %v1536, 30
    %v1538 = vsub.s32 %v1534, %v1537
    %vm1539 = vcmp.lt.s32.totalorder %v1538, 0
    %v1540 = vsub.s32 0, %v1538
    %v1541 = vsel %vm1539, %v1540, %v1538
    %v1542 = vclz %v1541
    %v1543 = vsub.s32 %v1542, 2
    %vm1544 = vcmp.gt.s32.totalorder 0, %v1543
    %v1545 = vsel %vm1544, 0, %v1543
    %v1546 = vsub.s32 32, %v1545
    %v1547 = vshll.u32 %v1538, %v1545
    %v1548 = vshrl.u32 %v1530, %v1546
    %v1549 = vor.u32 %v1547, %v1548
    %v1550 = vsub.s32 4294967266, %v1545
    %v1551 = vadd.s32 %v1550, 127
    %v1552 = vshll.u32 %v1551, 23
    %v1553 = vor.u32 4788187, %v1552
    %v1554 = vand.u32 2147483647, %v1553
    %v1556 = vcvt.s32.f32 %v1549
    %v1557 = vmul.f32 %v1556, %v1554
    %v1558 = vxor.u32 %v1557, 2147483648
    %v1559 = vsel %vm1476, %v1558, %v1557
    %v1560 = vsub.s32 4, %v1536
    %v1561 = vsel %vm1476, %v1560, %v1536
    %v1562 = vsel %vm1475, %v482, %v1559
    %v1563 = vsel %vm1475, 0, %v1561
    %v1564 = vcosq.f32.pop %v1562
    %v1565 = vsinq.f32.pop %v1562
    %vm1566 = vweird.f32 %v482
    %v1567 = vand.u32 %v1563, 3
    %vm1568 = vcmp.lt.s32.totalorder %v1567, 2
    %vm1569 = vcmp.eq.s32.totalorder %v1567, 0
    %v1570 = vxor.u32 %v1565, 2147483648
    %v1571 = vsel %vm1569, %v1564, %v1570
    %vm1572 = vcmp.eq.s32.totalorder %v1567, 2
    %v1573 = vxor.u32 %v1564, 2147483648
    %v1574 = vsel %vm1572, %v1573, %v1565
    %v1575 = vsel %vm1568, %v1571, %v1574
    %v1576 = vsel %vm1566, nan, %v1575
    %v1577 = vand.u32 2147483647, %v483
    %vm1578 = vcmp.le.f32.partialorder %v1577, 0.7853982
    %vm1579 = vcmp.lt.s32.totalorder %v483, 0
    %v1580 = vand.u32 %v483, 2139095040
    %v1581 = vshrl.u32 %v1580, 23
    %v1582 = vsub.s32 %v1581, 127
    %v1583 = vand.u32 2147483647, %v483
    %v1584 = vand.u32 %v1583, 8388607
    %v1585 = vor.u32 %v1584, 8388608
    %v1586 = vsub.s32 0, %v1585
    %v1587 = vadd.s32 %v1582, 1
    %vm1588 = vcmp.gt.s32.totalorder %v1587, 0
    %v1589 = vsel %vm1588, %v1587, 0
    %v1590 = vshrl.u32 %v1589, 5
    %v1591 = vand.u32 %v1589, 31
    %v1592 = vsub.s32 32, %v1591
    %v1593 = vshrl.u32 683565275, %v1592
    %v1594 = vshll.u32 683565275, %v1591
    %v1595 = vshrl.u32 2475754826, %v1592
    %v1596 = vor.u32 %v1594, %v1595
    %v1597 = vshll.u32 2475754826, %v1591
    %v1598 = vshrl.u32 2131351028, %v1592
    %v1599 = vor.u32 %v1597, %v1598
    %v1600 = vshll.u32 2131351028, %v1591
    %v1601 = vshrl.u32 2102212464, %v1592
    %v1602 = vor.u32 %v1600, %v1601
    %v1603 = vshll.u32 2102212464, %v1591
    %v1604 = vshrl.u32 920167782, %v1592
    %v1605 = vor.u32 %v1603, %v1604
    %v1606 = vshll.u32 920167782, %v1591
    %v1607 = vshrl.u32 1326507024, %v1592
    %v1608 = vor.u32 %v1606, %v1607
    %vm1609 = vcmp.lt.s32.totalorder %v1590, 1
    %vm1610 = vcmp.lt.s32.totalorder %v1590, 2
    %vm1611 = vcmp.lt.s32.totalorder %v1590, 3
    %vm1612 = vcmp.lt.s32.totalorder %v1590, 4
    %v1613 = vsel %vm1609, %v1593, %v1596
    %v1614 = vsel %vm1612, %v1602, 2102212464
    %v1615 = vsel %vm1611, %v1599, %v1614
    %v1616 = vsel %vm1610, %v1613, %v1615
    %v1617 = vsel %vm1609, %v1596, %v1599
    %v1618 = vsel %vm1612, %v1605, 920167782
    %v1619 = vsel %vm1611, %v1602, %v1618
    %v1620 = vsel %vm1610, %v1617, %v1619
    %v1621 = vsel %vm1609, %v1599, %v1602
    %v1622 = vsel %vm1612, %v1608, 1326507024
    %v1623 = vsel %vm1611, %v1605, %v1622
    %v1624 = vsel %vm1610, %v1621, %v1623
    %v1625 = vshll.u32 %v1585, 8
    %v1626 = vmul.u32.u64.compose %v1625, %v1624
    %v1627 = vextract.low.u32 %v1626
    %v1628 = vextract.high.u32 %v1626
    %v1629 = vmul.u32.u64.compose %v1625, %v1620
    %v1630 = vextract.low.u32 %v1629
    %v1631 = vextract.high.u32 %v1629
    %v1632 = vmul.u32 %v1625, %v1616
    %v1633 = vadd.s32 %v1628, %v1630
    %vm1634 = vc.u32 %v1628, %v1630
    %v1635 = vadd.s32 %v1631, 1
    %v1636 = vsel %vm1634, %v1635, %v1631
    %v1637 = vadd.s32 %v1632, %v1636
    %v1638 = vadd.s32 %v1637, 536870912
    %v1639 = vshrl.u32 %v1638, 30
    %v1640 = vshll.u32 %v1639, 30
    %v1641 = vsub.s32 %v1637, %v1640
    %vm1642 = vcmp.lt.s32.totalorder %v1641, 0
    %v1643 = vsub.s32 0, %v1641
    %v1644 = vsel %vm1642, %v1643, %v1641
    %v1645 = vclz %v1644
    %v1646 = vsub.s32 %v1645, 2
    %vm1647 = vcmp.gt.s32.totalorder 0, %v1646
    %v1648 = vsel %vm1647, 0, %v1646
    %v1649 = vsub.s32 32, %v1648
    %v1650 = vshll.u32 %v1641, %v1648
    %v1651 = vshrl.u32 %v1633, %v1649
    %v1652 = vor.u32 %v1650, %v1651
    %v1653 = vsub.s32 4294967266, %v1648
    %v1654 = vadd.s32 %v1653, 127
    %v1655 = vshll.u32 %v1654, 23
    %v1656 = vor.u32 4788187, %v1655
    %v1657 = vand.u32 2147483647, %v1656
    %v1659 = vcvt.s32.f32 %v1652
    %v1660 = vmul.f32 %v1659, %v1657
    %v1661 = vxor.u32 %v1660, 2147483648
    %v1662 = vsel %vm1579, %v1661, %v1660
    %v1663 = vsub.s32 4, %v1639
    %v1664 = vsel %vm1579, %v1663, %v1639
    %v1665 = vsel %vm1578, %v483, %v1662
    %v1666 = vsel %vm1578, 0, %v1664
    %v1667 = vcosq.f32.pop %v1665
    %v1668 = vsinq.f32.pop %v1665
    %vm1669 = vweird.f32 %v483
    %v1670 = vand.u32 %v1666, 3
    %vm1671 = vcmp.lt.s32.totalorder %v1670, 2
    %vm1672 = vcmp.eq.s32.totalorder %v1670, 0
    %v1673 = vxor.u32 %v1668, 2147483648
    %v1674 = vsel %vm1672, %v1667, %v1673
    %vm1675 = vcmp.eq.s32.totalorder %v1670, 2
    %v1676 = vxor.u32 %v1667, 2147483648
    %v1677 = vsel %vm1675, %v1676, %v1668
    %v1678 = vsel %vm1671, %v1674, %v1677
    %v1679 = vsel %vm1669, nan, %v1678
    %v1680 = vand.u32 2147483647, %v484
    %vm1681 = vcmp.le.f32.partialorder %v1680, 0.7853982
    %vm1682 = vcmp.lt.s32.totalorder %v484, 0
    %v1683 = vand.u32 %v484, 2139095040
    %v1684 = vshrl.u32 %v1683, 23
    %v1685 = vsub.s32 %v1684, 127
    %v1686 = vand.u32 2147483647, %v484
    %v1687 = vand.u32 %v1686, 8388607
    %v1688 = vor.u32 %v1687, 8388608
    %v1689 = vsub.s32 0, %v1688
    %v1690 = vadd.s32 %v1685, 1
    %vm1691 = vcmp.gt.s32.totalorder %v1690, 0
    %v1692 = vsel %vm1691, %v1690, 0
    %v1693 = vshrl.u32 %v1692, 5
    %v1694 = vand.u32 %v1692, 31
    %v1695 = vsub.s32 32, %v1694
    %v1696 = vshrl.u32 683565275, %v1695
    %v1697 = vshll.u32 683565275, %v1694
    %v1698 = vshrl.u32 2475754826, %v1695
    %v1699 = vor.u32 %v1697, %v1698
    %v1700 = vshll.u32 2475754826, %v1694
    %v1701 = vshrl.u32 2131351028, %v1695
    %v1702 = vor.u32 %v1700, %v1701
    %v1703 = vshll.u32 2131351028, %v1694
    %v1704 = vshrl.u32 2102212464, %v1695
    %v1705 = vor.u32 %v1703, %v1704
    %v1706 = vshll.u32 2102212464, %v1694
    %v1707 = vshrl.u32 920167782, %v1695
    %v1708 = vor.u32 %v1706, %v1707
    %v1709 = vshll.u32 920167782, %v1694
    %v1710 = vshrl.u32 1326507024, %v1695
    %v1711 = vor.u32 %v1709, %v1710
    %vm1712 = vcmp.lt.s32.totalorder %v1693, 1
    %vm1713 = vcmp.lt.s32.totalorder %v1693, 2
    %vm1714 = vcmp.lt.s32.totalorder %v1693, 3
    %vm1715 = vcmp.lt.s32.totalorder %v1693, 4
    %v1716 = vsel %vm1712, %v1696, %v1699
    %v1717 = vsel %vm1715, %v1705, 2102212464
    %v1718 = vsel %vm1714, %v1702, %v1717
    %v1719 = vsel %vm1713, %v1716, %v1718
    %v1720 = vsel %vm1712, %v1699, %v1702
    %v1721 = vsel %vm1715, %v1708, 920167782
    %v1722 = vsel %vm1714, %v1705, %v1721
    %v1723 = vsel %vm1713, %v1720, %v1722
    %v1724 = vsel %vm1712, %v1702, %v1705
    %v1725 = vsel %vm1715, %v1711, 1326507024
    %v1726 = vsel %vm1714, %v1708, %v1725
    %v1727 = vsel %vm1713, %v1724, %v1726
    %v1728 = vshll.u32 %v1688, 8
    %v1729 = vmul.u32.u64.compose %v1728, %v1727
    %v1730 = vextract.low.u32 %v1729
    %v1731 = vextract.high.u32 %v1729
    %v1732 = vmul.u32.u64.compose %v1728, %v1723
    %v1733 = vextract.low.u32 %v1732
    %v1734 = vextract.high.u32 %v1732
    %v1735 = vmul.u32 %v1728, %v1719
    %v1736 = vadd.s32 %v1731, %v1733
    %vm1737 = vc.u32 %v1731, %v1733
    %v1738 = vadd.s32 %v1734, 1
    %v1739 = vsel %vm1737, %v1738, %v1734
    %v1740 = vadd.s32 %v1735, %v1739
    %v1741 = vadd.s32 %v1740, 536870912
    %v1742 = vshrl.u32 %v1741, 30
    %v1743 = vshll.u32 %v1742, 30
    %v1744 = vsub.s32 %v1740, %v1743
    %vm1745 = vcmp.lt.s32.totalorder %v1744, 0
    %v1746 = vsub.s32 0, %v1744
    %v1747 = vsel %vm1745, %v1746, %v1744
    %v1748 = vclz %v1747
    %v1749 = vsub.s32 %v1748, 2
    %vm1750 = vcmp.gt.s32.totalorder 0, %v1749
    %v1751 = vsel %vm1750, 0, %v1749
    %v1752 = vsub.s32 32, %v1751
    %v1753 = vshll.u32 %v1744, %v1751
    %v1754 = vshrl.u32 %v1736, %v1752
    %v1755 = vor.u32 %v1753, %v1754
    %v1756 = vsub.s32 4294967266, %v1751
    %v1757 = vadd.s32 %v1756, 127
    %v1758 = vshll.u32 %v1757, 23
    %v1759 = vor.u32 4788187, %v1758
    %v1760 = vand.u32 2147483647, %v1759
    %v1762 = vcvt.s32.f32 %v1755
    %v1763 = vmul.f32 %v1762, %v1760
    %v1764 = vxor.u32 %v1763, 2147483648
    %v1765 = vsel %vm1682, %v1764, %v1763
    %v1766 = vsub.s32 4, %v1742
    %v1767 = vsel %vm1682, %v1766, %v1742
    %v1768 = vsel %vm1681, %v484, %v1765
    %v1769 = vsel %vm1681, 0, %v1767
    %v1770 = vcosq.f32.pop %v1768
    %v1771 = vsinq.f32.pop %v1768
    %vm1772 = vweird.f32 %v484
    %v1773 = vand.u32 %v1769, 3
    %vm1774 = vcmp.lt.s32.totalorder %v1773, 2
    %vm1775 = vcmp.eq.s32.totalorder %v1773, 0
    %v1776 = vxor.u32 %v1771, 2147483648
    %v1777 = vsel %vm1775, %v1770, %v1776
    %vm1778 = vcmp.eq.s32.totalorder %v1773, 2
    %v1779 = vxor.u32 %v1770, 2147483648
    %v1780 = vsel %vm1778, %v1779, %v1771
    %v1781 = vsel %vm1774, %v1777, %v1780
    %v1782 = vsel %vm1772, nan, %v1781
    %v1783 = vand.u32 2147483647, %v485
    %vm1784 = vcmp.le.f32.partialorder %v1783, 0.7853982
    %vm1785 = vcmp.lt.s32.totalorder %v485, 0
    %v1786 = vand.u32 %v485, 2139095040
    %v1787 = vshrl.u32 %v1786, 23
    %v1788 = vsub.s32 %v1787, 127
    %v1789 = vand.u32 2147483647, %v485
    %v1790 = vand.u32 %v1789, 8388607
    %v1791 = vor.u32 %v1790, 8388608
    %v1792 = vsub.s32 0, %v1791
    %v1793 = vadd.s32 %v1788, 1
    %vm1794 = vcmp.gt.s32.totalorder %v1793, 0
    %v1795 = vsel %vm1794, %v1793, 0
    %v1796 = vshrl.u32 %v1795, 5
    %v1797 = vand.u32 %v1795, 31
    %v1798 = vsub.s32 32, %v1797
    %v1799 = vshrl.u32 683565275, %v1798
    %v1800 = vshll.u32 683565275, %v1797
    %v1801 = vshrl.u32 2475754826, %v1798
    %v1802 = vor.u32 %v1800, %v1801
    %v1803 = vshll.u32 2475754826, %v1797
    %v1804 = vshrl.u32 2131351028, %v1798
    %v1805 = vor.u32 %v1803, %v1804
    %v1806 = vshll.u32 2131351028, %v1797
    %v1807 = vshrl.u32 2102212464, %v1798
    %v1808 = vor.u32 %v1806, %v1807
    %v1809 = vshll.u32 2102212464, %v1797
    %v1810 = vshrl.u32 920167782, %v1798
    %v1811 = vor.u32 %v1809, %v1810
    %v1812 = vshll.u32 920167782, %v1797
    %v1813 = vshrl.u32 1326507024, %v1798
    %v1814 = vor.u32 %v1812, %v1813
    %vm1815 = vcmp.lt.s32.totalorder %v1796, 1
    %vm1816 = vcmp.lt.s32.totalorder %v1796, 2
    %vm1817 = vcmp.lt.s32.totalorder %v1796, 3
    %vm1818 = vcmp.lt.s32.totalorder %v1796, 4
    %v1819 = vsel %vm1815, %v1799, %v1802
    %v1820 = vsel %vm1818, %v1808, 2102212464
    %v1821 = vsel %vm1817, %v1805, %v1820
    %v1822 = vsel %vm1816, %v1819, %v1821
    %v1823 = vsel %vm1815, %v1802, %v1805
    %v1824 = vsel %vm1818, %v1811, 920167782
    %v1825 = vsel %vm1817, %v1808, %v1824
    %v1826 = vsel %vm1816, %v1823, %v1825
    %v1827 = vsel %vm1815, %v1805, %v1808
    %v1828 = vsel %vm1818, %v1814, 1326507024
    %v1829 = vsel %vm1817, %v1811, %v1828
    %v1830 = vsel %vm1816, %v1827, %v1829
    %v1831 = vshll.u32 %v1791, 8
    %v1832 = vmul.u32.u64.compose %v1831, %v1830
    %v1833 = vextract.low.u32 %v1832
    %v1834 = vextract.high.u32 %v1832
    %v1835 = vmul.u32.u64.compose %v1831, %v1826
    %v1836 = vextract.low.u32 %v1835
    %v1837 = vextract.high.u32 %v1835
    %v1838 = vmul.u32 %v1831, %v1822
    %v1839 = vadd.s32 %v1834, %v1836
    %vm1840 = vc.u32 %v1834, %v1836
    %v1841 = vadd.s32 %v1837, 1
    %v1842 = vsel %vm1840, %v1841, %v1837
    %v1843 = vadd.s32 %v1838, %v1842
    %v1844 = vadd.s32 %v1843, 536870912
    %v1845 = vshrl.u32 %v1844, 30
    %v1846 = vshll.u32 %v1845, 30
    %v1847 = vsub.s32 %v1843, %v1846
    %vm1848 = vcmp.lt.s32.totalorder %v1847, 0
    %v1849 = vsub.s32 0, %v1847
    %v1850 = vsel %vm1848, %v1849, %v1847
    %v1851 = vclz %v1850
    %v1852 = vsub.s32 %v1851, 2
    %vm1853 = vcmp.gt.s32.totalorder 0, %v1852
    %v1854 = vsel %vm1853, 0, %v1852
    %v1855 = vsub.s32 32, %v1854
    %v1856 = vshll.u32 %v1847, %v1854
    %v1857 = vshrl.u32 %v1839, %v1855
    %v1858 = vor.u32 %v1856, %v1857
    %v1859 = vsub.s32 4294967266, %v1854
    %v1860 = vadd.s32 %v1859, 127
    %v1861 = vshll.u32 %v1860, 23
    %v1862 = vor.u32 4788187, %v1861
    %v1863 = vand.u32 2147483647, %v1862
    %v1865 = vcvt.s32.f32 %v1858
    %v1866 = vmul.f32 %v1865, %v1863
    %v1867 = vxor.u32 %v1866, 2147483648
    %v1868 = vsel %vm1785, %v1867, %v1866
    %v1869 = vsub.s32 4, %v1845
    %v1870 = vsel %vm1785, %v1869, %v1845
    %v1871 = vsel %vm1784, %v485, %v1868
    %v1872 = vsel %vm1784, 0, %v1870
    %v1873 = vcosq.f32.pop %v1871
    %v1874 = vsinq.f32.pop %v1871
    %vm1875 = vweird.f32 %v485
    %v1876 = vand.u32 %v1872, 3
    %vm1877 = vcmp.lt.s32.totalorder %v1876, 2
    %vm1878 = vcmp.eq.s32.totalorder %v1876, 0
    %v1879 = vxor.u32 %v1874, 2147483648
    %v1880 = vsel %vm1878, %v1873, %v1879
    %vm1881 = vcmp.eq.s32.totalorder %v1876, 2
    %v1882 = vxor.u32 %v1873, 2147483648
    %v1883 = vsel %vm1881, %v1882, %v1874
    %v1884 = vsel %vm1877, %v1880, %v1883
    %v1885 = vsel %vm1875, nan, %v1884
    %v1886 = vand.u32 2147483647, %v486
    %vm1887 = vcmp.le.f32.partialorder %v1886, 0.7853982
    %vm1888 = vcmp.lt.s32.totalorder %v486, 0
    %v1889 = vand.u32 %v486, 2139095040
    %v1890 = vshrl.u32 %v1889, 23
    %v1891 = vsub.s32 %v1890, 127
    %v1892 = vand.u32 2147483647, %v486
    %v1893 = vand.u32 %v1892, 8388607
    %v1894 = vor.u32 %v1893, 8388608
    %v1895 = vsub.s32 0, %v1894
    %v1896 = vadd.s32 %v1891, 1
    %vm1897 = vcmp.gt.s32.totalorder %v1896, 0
    %v1898 = vsel %vm1897, %v1896, 0
    %v1899 = vshrl.u32 %v1898, 5
    %v1900 = vand.u32 %v1898, 31
    %v1901 = vsub.s32 32, %v1900
    %v1902 = vshrl.u32 683565275, %v1901
    %v1903 = vshll.u32 683565275, %v1900
    %v1904 = vshrl.u32 2475754826, %v1901
    %v1905 = vor.u32 %v1903, %v1904
    %v1906 = vshll.u32 2475754826, %v1900
    %v1907 = vshrl.u32 2131351028, %v1901
    %v1908 = vor.u32 %v1906, %v1907
    %v1909 = vshll.u32 2131351028, %v1900
    %v1910 = vshrl.u32 2102212464, %v1901
    %v1911 = vor.u32 %v1909, %v1910
    %v1912 = vshll.u32 2102212464, %v1900
    %v1913 = vshrl.u32 920167782, %v1901
    %v1914 = vor.u32 %v1912, %v1913
    %v1915 = vshll.u32 920167782, %v1900
    %v1916 = vshrl.u32 1326507024, %v1901
    %v1917 = vor.u32 %v1915, %v1916
    %vm1918 = vcmp.lt.s32.totalorder %v1899, 1
    %vm1919 = vcmp.lt.s32.totalorder %v1899, 2
    %vm1920 = vcmp.lt.s32.totalorder %v1899, 3
    %vm1921 = vcmp.lt.s32.totalorder %v1899, 4
    %v1922 = vsel %vm1918, %v1902, %v1905
    %v1923 = vsel %vm1921, %v1911, 2102212464
    %v1924 = vsel %vm1920, %v1908, %v1923
    %v1925 = vsel %vm1919, %v1922, %v1924
    %v1926 = vsel %vm1918, %v1905, %v1908
    %v1927 = vsel %vm1921, %v1914, 920167782
    %v1928 = vsel %vm1920, %v1911, %v1927
    %v1929 = vsel %vm1919, %v1926, %v1928
    %v1930 = vsel %vm1918, %v1908, %v1911
    %v1931 = vsel %vm1921, %v1917, 1326507024
    %v1932 = vsel %vm1920, %v1914, %v1931
    %v1933 = vsel %vm1919, %v1930, %v1932
    %v1934 = vshll.u32 %v1894, 8
    %v1935 = vmul.u32.u64.compose %v1934, %v1933
    %v1936 = vextract.low.u32 %v1935
    %v1937 = vextract.high.u32 %v1935
    %v1938 = vmul.u32.u64.compose %v1934, %v1929
    %v1939 = vextract.low.u32 %v1938
    %v1940 = vextract.high.u32 %v1938
    %v1941 = vmul.u32 %v1934, %v1925
    %v1942 = vadd.s32 %v1937, %v1939
    %vm1943 = vc.u32 %v1937, %v1939
    %v1944 = vadd.s32 %v1940, 1
    %v1945 = vsel %vm1943, %v1944, %v1940
    %v1946 = vadd.s32 %v1941, %v1945
    %v1947 = vadd.s32 %v1946, 536870912
    %v1948 = vshrl.u32 %v1947, 30
    %v1949 = vshll.u32 %v1948, 30
    %v1950 = vsub.s32 %v1946, %v1949
    %vm1951 = vcmp.lt.s32.totalorder %v1950, 0
    %v1952 = vsub.s32 0, %v1950
    %v1953 = vsel %vm1951, %v1952, %v1950
    %v1954 = vclz %v1953
    %v1955 = vsub.s32 %v1954, 2
    %vm1956 = vcmp.gt.s32.totalorder 0, %v1955
    %v1957 = vsel %vm1956, 0, %v1955
    %v1958 = vsub.s32 32, %v1957
    %v1959 = vshll.u32 %v1950, %v1957
    %v1960 = vshrl.u32 %v1942, %v1958
    %v1961 = vor.u32 %v1959, %v1960
    %v1962 = vsub.s32 4294967266, %v1957
    %v1963 = vadd.s32 %v1962, 127
    %v1964 = vshll.u32 %v1963, 23
    %v1965 = vor.u32 4788187, %v1964
    %v1966 = vand.u32 2147483647, %v1965
    %v1968 = vcvt.s32.f32 %v1961
    %v1969 = vmul.f32 %v1968, %v1966
    %v1970 = vxor.u32 %v1969, 2147483648
    %v1971 = vsel %vm1888, %v1970, %v1969
    %v1972 = vsub.s32 4, %v1948
    %v1973 = vsel %vm1888, %v1972, %v1948
    %v1974 = vsel %vm1887, %v486, %v1971
    %v1975 = vsel %vm1887, 0, %v1973
    %v1976 = vcosq.f32.pop %v1974
    %v1977 = vsinq.f32.pop %v1974
    %vm1978 = vweird.f32 %v486
    %v1979 = vand.u32 %v1975, 3
    %vm1980 = vcmp.lt.s32.totalorder %v1979, 2
    %vm1981 = vcmp.eq.s32.totalorder %v1979, 0
    %v1982 = vxor.u32 %v1977, 2147483648
    %v1983 = vsel %vm1981, %v1976, %v1982
    %vm1984 = vcmp.eq.s32.totalorder %v1979, 2
    %v1985 = vxor.u32 %v1976, 2147483648
    %v1986 = vsel %vm1984, %v1985, %v1977
    %v1987 = vsel %vm1980, %v1983, %v1986
    %v1988 = vsel %vm1978, nan, %v1987
    %v1989 = vand.u32 2147483647, %v487
    %vm1990 = vcmp.le.f32.partialorder %v1989, 0.7853982
    %vm1991 = vcmp.lt.s32.totalorder %v487, 0
    %v1992 = vand.u32 %v487, 2139095040
    %v1993 = vshrl.u32 %v1992, 23
    %v1994 = vsub.s32 %v1993, 127
    %v1995 = vand.u32 2147483647, %v487
    %v1996 = vand.u32 %v1995, 8388607
    %v1997 = vor.u32 %v1996, 8388608
    %v1998 = vsub.s32 0, %v1997
    %v1999 = vadd.s32 %v1994, 1
    %vm2000 = vcmp.gt.s32.totalorder %v1999, 0
    %v2001 = vsel %vm2000, %v1999, 0
    %v2002 = vshrl.u32 %v2001, 5
    %v2003 = vand.u32 %v2001, 31
    %v2004 = vsub.s32 32, %v2003
    %v2005 = vshrl.u32 683565275, %v2004
    %v2006 = vshll.u32 683565275, %v2003
    %v2007 = vshrl.u32 2475754826, %v2004
    %v2008 = vor.u32 %v2006, %v2007
    %v2009 = vshll.u32 2475754826, %v2003
    %v2010 = vshrl.u32 2131351028, %v2004
    %v2011 = vor.u32 %v2009, %v2010
    %v2012 = vshll.u32 2131351028, %v2003
    %v2013 = vshrl.u32 2102212464, %v2004
    %v2014 = vor.u32 %v2012, %v2013
    %v2015 = vshll.u32 2102212464, %v2003
    %v2016 = vshrl.u32 920167782, %v2004
    %v2017 = vor.u32 %v2015, %v2016
    %v2018 = vshll.u32 920167782, %v2003
    %v2019 = vshrl.u32 1326507024, %v2004
    %v2020 = vor.u32 %v2018, %v2019
    %vm2021 = vcmp.lt.s32.totalorder %v2002, 1
    %vm2022 = vcmp.lt.s32.totalorder %v2002, 2
    %vm2023 = vcmp.lt.s32.totalorder %v2002, 3
    %vm2024 = vcmp.lt.s32.totalorder %v2002, 4
    %v2025 = vsel %vm2021, %v2005, %v2008
    %v2026 = vsel %vm2024, %v2014, 2102212464
    %v2027 = vsel %vm2023, %v2011, %v2026
    %v2028 = vsel %vm2022, %v2025, %v2027
    %v2029 = vsel %vm2021, %v2008, %v2011
    %v2030 = vsel %vm2024, %v2017, 920167782
    %v2031 = vsel %vm2023, %v2014, %v2030
    %v2032 = vsel %vm2022, %v2029, %v2031
    %v2033 = vsel %vm2021, %v2011, %v2014
    %v2034 = vsel %vm2024, %v2020, 1326507024
    %v2035 = vsel %vm2023, %v2017, %v2034
    %v2036 = vsel %vm2022, %v2033, %v2035
    %v2037 = vshll.u32 %v1997, 8
    %v2038 = vmul.u32.u64.compose %v2037, %v2036
    %v2039 = vextract.low.u32 %v2038
    %v2040 = vextract.high.u32 %v2038
    %v2041 = vmul.u32.u64.compose %v2037, %v2032
    %v2042 = vextract.low.u32 %v2041
    %v2043 = vextract.high.u32 %v2041
    %v2044 = vmul.u32 %v2037, %v2028
    %v2045 = vadd.s32 %v2040, %v2042
    %vm2046 = vc.u32 %v2040, %v2042
    %v2047 = vadd.s32 %v2043, 1
    %v2048 = vsel %vm2046, %v2047, %v2043
    %v2049 = vadd.s32 %v2044, %v2048
    %v2050 = vadd.s32 %v2049, 536870912
    %v2051 = vshrl.u32 %v2050, 30
    %v2052 = vshll.u32 %v2051, 30
    %v2053 = vsub.s32 %v2049, %v2052
    %vm2054 = vcmp.lt.s32.totalorder %v2053, 0
    %v2055 = vsub.s32 0, %v2053
    %v2056 = vsel %vm2054, %v2055, %v2053
    %v2057 = vclz %v2056
    %v2058 = vsub.s32 %v2057, 2
    %vm2059 = vcmp.gt.s32.totalorder 0, %v2058
    %v2060 = vsel %vm2059, 0, %v2058
    %v2061 = vsub.s32 32, %v2060
    %v2062 = vshll.u32 %v2053, %v2060
    %v2063 = vshrl.u32 %v2045, %v2061
    %v2064 = vor.u32 %v2062, %v2063
    %v2065 = vsub.s32 4294967266, %v2060
    %v2066 = vadd.s32 %v2065, 127
    %v2067 = vshll.u32 %v2066, 23
    %v2068 = vor.u32 4788187, %v2067
    %v2069 = vand.u32 2147483647, %v2068
    %v2071 = vcvt.s32.f32 %v2064
    %v2072 = vmul.f32 %v2071, %v2069
    %v2073 = vxor.u32 %v2072, 2147483648
    %v2074 = vsel %vm1991, %v2073, %v2072
    %v2075 = vsub.s32 4, %v2051
    %v2076 = vsel %vm1991, %v2075, %v2051
    %v2077 = vsel %vm1990, %v487, %v2074
    %v2078 = vsel %vm1990, 0, %v2076
    %v2079 = vcosq.f32.pop %v2077
    %v2080 = vsinq.f32.pop %v2077
    %vm2081 = vweird.f32 %v487
    %v2082 = vand.u32 %v2078, 3
    %vm2083 = vcmp.lt.s32.totalorder %v2082, 2
    %vm2084 = vcmp.eq.s32.totalorder %v2082, 0
    %v2085 = vxor.u32 %v2080, 2147483648
    %v2086 = vsel %vm2084, %v2079, %v2085
    %vm2087 = vcmp.eq.s32.totalorder %v2082, 2
    %v2088 = vxor.u32 %v2079, 2147483648
    %v2089 = vsel %vm2087, %v2088, %v2080
    %v2090 = vsel %vm2083, %v2086, %v2089
    %v2091 = vsel %vm2081, nan, %v2090
    %v2092 = vand.u32 2147483647, %v488
    %vm2093 = vcmp.le.f32.partialorder %v2092, 0.7853982
    %vm2094 = vcmp.lt.s32.totalorder %v488, 0
    %v2095 = vand.u32 %v488, 2139095040
    %v2096 = vshrl.u32 %v2095, 23
    %v2097 = vsub.s32 %v2096, 127
    %v2098 = vand.u32 2147483647, %v488
    %v2099 = vand.u32 %v2098, 8388607
    %v2100 = vor.u32 %v2099, 8388608
    %v2101 = vsub.s32 0, %v2100
    %v2102 = vadd.s32 %v2097, 1
    %vm2103 = vcmp.gt.s32.totalorder %v2102, 0
    %v2104 = vsel %vm2103, %v2102, 0
    %v2105 = vshrl.u32 %v2104, 5
    %v2106 = vand.u32 %v2104, 31
    %v2107 = vsub.s32 32, %v2106
    %v2108 = vshrl.u32 683565275, %v2107
    %v2109 = vshll.u32 683565275, %v2106
    %v2110 = vshrl.u32 2475754826, %v2107
    %v2111 = vor.u32 %v2109, %v2110
    %v2112 = vshll.u32 2475754826, %v2106
    %v2113 = vshrl.u32 2131351028, %v2107
    %v2114 = vor.u32 %v2112, %v2113
    %v2115 = vshll.u32 2131351028, %v2106
    %v2116 = vshrl.u32 2102212464, %v2107
    %v2117 = vor.u32 %v2115, %v2116
    %v2118 = vshll.u32 2102212464, %v2106
    %v2119 = vshrl.u32 920167782, %v2107
    %v2120 = vor.u32 %v2118, %v2119
    %v2121 = vshll.u32 920167782, %v2106
    %v2122 = vshrl.u32 1326507024, %v2107
    %v2123 = vor.u32 %v2121, %v2122
    %vm2124 = vcmp.lt.s32.totalorder %v2105, 1
    %vm2125 = vcmp.lt.s32.totalorder %v2105, 2
    %vm2126 = vcmp.lt.s32.totalorder %v2105, 3
    %vm2127 = vcmp.lt.s32.totalorder %v2105, 4
    %v2128 = vsel %vm2124, %v2108, %v2111
    %v2129 = vsel %vm2127, %v2117, 2102212464
    %v2130 = vsel %vm2126, %v2114, %v2129
    %v2131 = vsel %vm2125, %v2128, %v2130
    %v2132 = vsel %vm2124, %v2111, %v2114
    %v2133 = vsel %vm2127, %v2120, 920167782
    %v2134 = vsel %vm2126, %v2117, %v2133
    %v2135 = vsel %vm2125, %v2132, %v2134
    %v2136 = vsel %vm2124, %v2114, %v2117
    %v2137 = vsel %vm2127, %v2123, 1326507024
    %v2138 = vsel %vm2126, %v2120, %v2137
    %v2139 = vsel %vm2125, %v2136, %v2138
    %v2140 = vshll.u32 %v2100, 8
    %v2141 = vmul.u32.u64.compose %v2140, %v2139
    %v2142 = vextract.low.u32 %v2141
    %v2143 = vextract.high.u32 %v2141
    %v2144 = vmul.u32.u64.compose %v2140, %v2135
    %v2145 = vextract.low.u32 %v2144
    %v2146 = vextract.high.u32 %v2144
    %v2147 = vmul.u32 %v2140, %v2131
    %v2148 = vadd.s32 %v2143, %v2145
    %vm2149 = vc.u32 %v2143, %v2145
    %v2150 = vadd.s32 %v2146, 1
    %v2151 = vsel %vm2149, %v2150, %v2146
    %v2152 = vadd.s32 %v2147, %v2151
    %v2153 = vadd.s32 %v2152, 536870912
    %v2154 = vshrl.u32 %v2153, 30
    %v2155 = vshll.u32 %v2154, 30
    %v2156 = vsub.s32 %v2152, %v2155
    %vm2157 = vcmp.lt.s32.totalorder %v2156, 0
    %v2158 = vsub.s32 0, %v2156
    %v2159 = vsel %vm2157, %v2158, %v2156
    %v2160 = vclz %v2159
    %v2161 = vsub.s32 %v2160, 2
    %vm2162 = vcmp.gt.s32.totalorder 0, %v2161
    %v2163 = vsel %vm2162, 0, %v2161
    %v2164 = vsub.s32 32, %v2163
    %v2165 = vshll.u32 %v2156, %v2163
    %v2166 = vshrl.u32 %v2148, %v2164
    %v2167 = vor.u32 %v2165, %v2166
    %v2168 = vsub.s32 4294967266, %v2163
    %v2169 = vadd.s32 %v2168, 127
    %v2170 = vshll.u32 %v2169, 23
    %v2171 = vor.u32 4788187, %v2170
    %v2172 = vand.u32 2147483647, %v2171
    %v2174 = vcvt.s32.f32 %v2167
    %v2175 = vmul.f32 %v2174, %v2172
    %v2176 = vxor.u32 %v2175, 2147483648
    %v2177 = vsel %vm2094, %v2176, %v2175
    %v2178 = vsub.s32 4, %v2154
    %v2179 = vsel %vm2094, %v2178, %v2154
    %v2180 = vsel %vm2093, %v488, %v2177
    %v2181 = vsel %vm2093, 0, %v2179
    %v2182 = vcosq.f32.pop %v2180
    %v2183 = vsinq.f32.pop %v2180
    %vm2184 = vweird.f32 %v488
    %v2185 = vand.u32 %v2181, 3
    %vm2186 = vcmp.lt.s32.totalorder %v2185, 2
    %vm2187 = vcmp.eq.s32.totalorder %v2185, 0
    %v2188 = vxor.u32 %v2183, 2147483648
    %v2189 = vsel %vm2187, %v2182, %v2188
    %vm2190 = vcmp.eq.s32.totalorder %v2185, 2
    %v2191 = vxor.u32 %v2182, 2147483648
    %v2192 = vsel %vm2190, %v2191, %v2183
    %v2193 = vsel %vm2186, %v2189, %v2192
    %v2194 = vsel %vm2184, nan, %v2193
    %v2195 = vand.u32 2147483647, %v489
    %vm2196 = vcmp.le.f32.partialorder %v2195, 0.7853982
    %vm2197 = vcmp.lt.s32.totalorder %v489, 0
    %v2198 = vand.u32 %v489, 2139095040
    %v2199 = vshrl.u32 %v2198, 23
    %v2200 = vsub.s32 %v2199, 127
    %v2201 = vand.u32 2147483647, %v489
    %v2202 = vand.u32 %v2201, 8388607
    %v2203 = vor.u32 %v2202, 8388608
    %v2204 = vsub.s32 0, %v2203
    %v2205 = vadd.s32 %v2200, 1
    %vm2206 = vcmp.gt.s32.totalorder %v2205, 0
    %v2207 = vsel %vm2206, %v2205, 0
    %v2208 = vshrl.u32 %v2207, 5
    %v2209 = vand.u32 %v2207, 31
    %v2210 = vsub.s32 32, %v2209
    %v2211 = vshrl.u32 683565275, %v2210
    %v2212 = vshll.u32 683565275, %v2209
    %v2213 = vshrl.u32 2475754826, %v2210
    %v2214 = vor.u32 %v2212, %v2213
    %v2215 = vshll.u32 2475754826, %v2209
    %v2216 = vshrl.u32 2131351028, %v2210
    %v2217 = vor.u32 %v2215, %v2216
    %v2218 = vshll.u32 2131351028, %v2209
    %v2219 = vshrl.u32 2102212464, %v2210
    %v2220 = vor.u32 %v2218, %v2219
    %v2221 = vshll.u32 2102212464, %v2209
    %v2222 = vshrl.u32 920167782, %v2210
    %v2223 = vor.u32 %v2221, %v2222
    %v2224 = vshll.u32 920167782, %v2209
    %v2225 = vshrl.u32 1326507024, %v2210
    %v2226 = vor.u32 %v2224, %v2225
    %vm2227 = vcmp.lt.s32.totalorder %v2208, 1
    %vm2228 = vcmp.lt.s32.totalorder %v2208, 2
    %vm2229 = vcmp.lt.s32.totalorder %v2208, 3
    %vm2230 = vcmp.lt.s32.totalorder %v2208, 4
    %v2231 = vsel %vm2227, %v2211, %v2214
    %v2232 = vsel %vm2230, %v2220, 2102212464
    %v2233 = vsel %vm2229, %v2217, %v2232
    %v2234 = vsel %vm2228, %v2231, %v2233
    %v2235 = vsel %vm2227, %v2214, %v2217
    %v2236 = vsel %vm2230, %v2223, 920167782
    %v2237 = vsel %vm2229, %v2220, %v2236
    %v2238 = vsel %vm2228, %v2235, %v2237
    %v2239 = vsel %vm2227, %v2217, %v2220
    %v2240 = vsel %vm2230, %v2226, 1326507024
    %v2241 = vsel %vm2229, %v2223, %v2240
    %v2242 = vsel %vm2228, %v2239, %v2241
    %v2243 = vshll.u32 %v2203, 8
    %v2244 = vmul.u32.u64.compose %v2243, %v2242
    %v2245 = vextract.low.u32 %v2244
    %v2246 = vextract.high.u32 %v2244
    %v2247 = vmul.u32.u64.compose %v2243, %v2238
    %v2248 = vextract.low.u32 %v2247
    %v2249 = vextract.high.u32 %v2247
    %v2250 = vmul.u32 %v2243, %v2234
    %v2251 = vadd.s32 %v2246, %v2248
    %vm2252 = vc.u32 %v2246, %v2248
    %v2253 = vadd.s32 %v2249, 1
    %v2254 = vsel %vm2252, %v2253, %v2249
    %v2255 = vadd.s32 %v2250, %v2254
    %v2256 = vadd.s32 %v2255, 536870912
    %v2257 = vshrl.u32 %v2256, 30
    %v2258 = vshll.u32 %v2257, 30
    %v2259 = vsub.s32 %v2255, %v2258
    %vm2260 = vcmp.lt.s32.totalorder %v2259, 0
    %v2261 = vsub.s32 0, %v2259
    %v2262 = vsel %vm2260, %v2261, %v2259
    %v2263 = vclz %v2262
    %v2264 = vsub.s32 %v2263, 2
    %vm2265 = vcmp.gt.s32.totalorder 0, %v2264
    %v2266 = vsel %vm2265, 0, %v2264
    %v2267 = vsub.s32 32, %v2266
    %v2268 = vshll.u32 %v2259, %v2266
    %v2269 = vshrl.u32 %v2251, %v2267
    %v2270 = vor.u32 %v2268, %v2269
    %v2271 = vsub.s32 4294967266, %v2266
    %v2272 = vadd.s32 %v2271, 127
    %v2273 = vshll.u32 %v2272, 23
    %v2274 = vor.u32 4788187, %v2273
    %v2275 = vand.u32 2147483647, %v2274
    %v2277 = vcvt.s32.f32 %v2270
    %v2278 = vmul.f32 %v2277, %v2275
    %v2279 = vxor.u32 %v2278, 2147483648
    %v2280 = vsel %vm2197, %v2279, %v2278
    %v2281 = vsub.s32 4, %v2257
    %v2282 = vsel %vm2197, %v2281, %v2257
    %v2283 = vsel %vm2196, %v489, %v2280
    %v2284 = vsel %vm2196, 0, %v2282
    %v2285 = vcosq.f32.pop %v2283
    %v2286 = vsinq.f32.pop %v2283
    %vm2287 = vweird.f32 %v489
    %v2288 = vand.u32 %v2284, 3
    %vm2289 = vcmp.lt.s32.totalorder %v2288, 2
    %vm2290 = vcmp.eq.s32.totalorder %v2288, 0
    %v2291 = vxor.u32 %v2286, 2147483648
    %v2292 = vsel %vm2290, %v2285, %v2291
    %vm2293 = vcmp.eq.s32.totalorder %v2288, 2
    %v2294 = vxor.u32 %v2285, 2147483648
    %v2295 = vsel %vm2293, %v2294, %v2286
    %v2296 = vsel %vm2289, %v2292, %v2295
    %v2297 = vsel %vm2287, nan, %v2296
    %v2298 = vmul.f32 %v544, %v752
    %v2299 = vmul.f32 %v551, %v855
    %v2300 = vmul.f32 %v558, %v958
    %v2301 = vmul.f32 %v565, %v1061
    %v2302 = vmul.f32 %v572, %v1164
    %v2303 = vmul.f32 %v579, %v1267
    %v2304 = vmul.f32 %v586, %v1370
    %v2305 = vmul.f32 %v593, %v1473
    %v2306 = vmul.f32 %v600, %v1576
    %v2307 = vmul.f32 %v607, %v1679
    %v2308 = vmul.f32 %v614, %v1782
    %v2309 = vmul.f32 %v621, %v1885
    %v2310 = vmul.f32 %v628, %v1988
    %v2311 = vmul.f32 %v635, %v2091
    %v2312 = vmul.f32 %v642, %v2194
    %v2313 = vmul.f32 %v649, %v2297
    %v2314 = vld [vmem:[#allocation3] sm:$0xff]
    %v2315 = vld [vmem:[#allocation3 + $0x8] sm:$0xff]
    %v2316 = vmul.f32 %v2298, 0.5
    %v2317 = vmul.f32 %v2299, 0.5
    %v2318 = vmul.f32 %v2300, 0.5
    %v2319 = vmul.f32 %v2301, 0.5
    %v2320 = vmul.f32 %v2302, 0.5
    %v2321 = vmul.f32 %v2303, 0.5
    %v2322 = vmul.f32 %v2304, 0.5
    %v2323 = vmul.f32 %v2305, 0.5
    %v2324 = vmul.f32 %v2306, 0.5
    %v2325 = vmul.f32 %v2307, 0.5
    %v2326 = vmul.f32 %v2308, 0.5
    %v2327 = vmul.f32 %v2309, 0.5
    %v2328 = vmul.f32 %v2310, 0.5
    %v2329 = vmul.f32 %v2311, 0.5
    %v2330 = vmul.f32 %v2312, 0.5
    %v2331 = vmul.f32 %v2313, 0.5
    %v2348 = vcombine.low %v2316, %v2317
    %v2349 = vcombine.low %v2318, %v2319
    %v2350 = vcombine.low %v2320, %v2321
    %v2351 = vcombine.low %v2322, %v2323
    %v2353 = vunpack.c.l.s4 1966171168
    %v2354 = vunpack.c.0.s8 %v2353
    %v2355 = vlaneseq
    %v2356 = vshrl.u32 %v2355, 7
    %v2357 = vsub.s32 %v2354, %v2356
    %v2358 = vrot.slane %v2348, %v2357
    %v2360 = vunpack.c.l.s4 1966171168
    %v2361 = vunpack.c.0.s8 %v2360
    %v2362 = vlaneseq
    %v2363 = vshrl.u32 %v2362, 7
    %v2364 = vsub.s32 %v2361, %v2363
    %v2365 = vrot.slane %v2349, %v2364
    %v2367 = vunpack.c.l.s4 1966171168
    %v2368 = vunpack.c.0.s8 %v2367
    %v2369 = vlaneseq
    %v2370 = vshrl.u32 %v2369, 7
    %v2371 = vsub.s32 %v2368, %v2370
    %v2372 = vrot.slane %v2350, %v2371
    %v2374 = vunpack.c.l.s4 1966171168
    %v2375 = vunpack.c.0.s8 %v2374
    %v2376 = vlaneseq
    %v2377 = vshrl.u32 %v2376, 7
    %v2378 = vsub.s32 %v2375, %v2377
    %v2379 = vrot.slane %v2351, %v2378
    %v2380 = vcombine.low %v2358, %v2365
    %v2381 = vcombine.low %v2372, %v2379
    %v2383 = vunpack.c.l.s4 1966171168
    %v2384 = vunpack.c.0.s8 %v2383
    %v2385 = vlaneseq
    %v2386 = vshrl.u32 %v2385, 7
    %v2387 = vsub.s32 %v2384, %v2386
    %v2388 = vrot.slane %v2380, %v2387
    %v2390 = vunpack.c.l.s4 1966171168
    %v2391 = vunpack.c.0.s8 %v2390
    %v2392 = vlaneseq
    %v2393 = vshrl.u32 %v2392, 7
    %v2394 = vsub.s32 %v2391, %v2393
    %v2395 = vrot.slane %v2381, %v2394
    %v2396 = vcombine.low %v2388, %v2395
    %v2397 = vcombine.low %v2324, %v2325
    %v2398 = vcombine.low %v2326, %v2327
    %v2399 = vcombine.low %v2328, %v2329
    %v2400 = vcombine.low %v2330, %v2331
    %v2402 = vunpack.c.l.s4 1966171168
    %v2403 = vunpack.c.0.s8 %v2402
    %v2404 = vlaneseq
    %v2405 = vshrl.u32 %v2404, 7
    %v2406 = vsub.s32 %v2403, %v2405
    %v2407 = vrot.slane %v2397, %v2406
    %v2409 = vunpack.c.l.s4 1966171168
    %v2410 = vunpack.c.0.s8 %v2409
    %v2411 = vlaneseq
    %v2412 = vshrl.u32 %v2411, 7
    %v2413 = vsub.s32 %v2410, %v2412
    %v2414 = vrot.slane %v2398, %v2413
    %v2416 = vunpack.c.l.s4 1966171168
    %v2417 = vunpack.c.0.s8 %v2416
    %v2418 = vlaneseq
    %v2419 = vshrl.u32 %v2418, 7
    %v2420 = vsub.s32 %v2417, %v2419
    %v2421 = vrot.slane %v2399, %v2420
    %v2423 = vunpack.c.l.s4 1966171168
    %v2424 = vunpack.c.0.s8 %v2423
    %v2425 = vlaneseq
    %v2426 = vshrl.u32 %v2425, 7
    %v2427 = vsub.s32 %v2424, %v2426
    %v2428 = vrot.slane %v2400, %v2427
    %v2429 = vcombine.low %v2407, %v2414
    %v2430 = vcombine.low %v2421, %v2428
    %v2432 = vunpack.c.l.s4 1966171168
    %v2433 = vunpack.c.0.s8 %v2432
    %v2434 = vlaneseq
    %v2435 = vshrl.u32 %v2434, 7
    %v2436 = vsub.s32 %v2433, %v2435
    %v2437 = vrot.slane %v2429, %v2436
    %v2439 = vunpack.c.l.s4 1966171168
    %v2440 = vunpack.c.0.s8 %v2439
    %v2441 = vlaneseq
    %v2442 = vshrl.u32 %v2441, 7
    %v2443 = vsub.s32 %v2440, %v2442
    %v2444 = vrot.slane %v2430, %v2443
    %v2445 = vcombine.low %v2437, %v2444
    %v2448 = vadd.f32 %v2314, %v2396
    %v2449 = vadd.f32 %v2315, %v2445
    %2450 = vst [vmem:[#allocation6] sm:$0xff] %v2448
    %2451 = vst [vmem:[#allocation6 + $0x8] sm:$0xff] %v2449
    // Predicated region
    $region14: #{tpu_custom_call.1} parent=1 // pred_check
      _
    $region15: #{tpu_custom_call.1} parent=1 // pred_check_branch
      %2453 = sbr.rel (0) target = $region17
    $region16: #{tpu_custom_call.1} parent=1 // pred_region
      %s2455 = ssub.s32 256, 256
      %2456 = vsyncadd [#allocation5], %s2455
      %s2458 = sshll.u32 [#allocation6], 4
      %s2459 = int_to_ptr.vmem [resolvable:$true] %s2458
      %2461 = dma.vmem_to_hbm [thread:$0]  %s2459, 256, %s2, [#allocation5]
    $region17: #{tpu_custom_call.1} parent=1 // pred_fallthru
      _
    // Predicated region
    $region18: #{tpu_custom_call.1} parent=1 // pred_check
      _
    $region19: #{tpu_custom_call.1} parent=1 // pred_check_branch
      %2463 = sbr.rel (0) target = $region21
    $region20: #{tpu_custom_call.1} parent=1 // pred_region
      %2464 = dma.done [#allocation5], 256
    $region21: #{tpu_custom_call.1} parent=1 // pred_fallthru
      _
    %2465 = vsyncpa [#allocation4], 1
    %2466 = vsyncpa [#allocation5], 1

</llo_original>
